<compile_context>
chip_gen: v5e
topology: v5e:2x2
jax: 0.10.0
libtpu: 0.0.40
codegen_flags: <defaults>
</compile_context>

<pallas_src>
import jax
import jax.numpy as jnp
from jax.experimental import pallas as pl
from jax.experimental.pallas import tpu as pltpu

# Safe on v5e/v6e (128 MiB physical) and v7x (64 MiB physical); working set at tb=1024 ~ 20 MiB.
_VMEM_LIMIT = 40 * 1024 * 1024


# ---------------------------------------------------------------------------
# Fused kernel: visual_fc + aux heads + prev-action embedding + masked LSTM step
# ---------------------------------------------------------------------------
def _cnn_lstm_fused_kernel(curr_ref, goal_ref, emb_ref, pa_ref, mask_ref, hc_in_ref,
                           w_curr_ref, w_goal_ref, w_emb_ref, b1_ref, ba1_ref, bb1_ref,
                           w2_ref, b2_ref, wa2_ref, wb2_ref, aux_b_ref,
                           emb_w_ref, wih_f_ref, whh_ref, b_lstm_ref,
                           preds_ref, hc_out_ref):
    f32 = jnp.float32
    bf16 = jnp.bfloat16
    tb, f_dim = curr_ref.shape
    hidden = hc_in_ref.shape[-1]
    h2 = 2 * hidden
    n_emb = emb_w_ref.shape[0]

    curr = curr_ref[...].astype(bf16)
    goal = goal_ref[...].astype(bf16)
    emb = emb_ref[...].astype(bf16)

    # One MXU matmul per input against the output-concatenated head weights.
    r_curr = jnp.dot(curr, w_curr_ref[...], preferred_element_type=f32)   # (tb, 2H+2F)
    r_goal = jnp.dot(goal, w_goal_ref[...], preferred_element_type=f32)   # (tb, 2H+F)
    r_emb = jnp.dot(emb, w_emb_ref[...], preferred_element_type=f32)      # (tb, 2H)

    # visual_fc layer 1 (+ReLU) and layer 2 (+ReLU); feats never leaves VMEM.
    h1 = jnp.maximum(r_curr[:, :h2] + r_goal[:, :h2] + r_emb + b1_ref[...], 0.0)
    feats = jnp.dot(h1.astype(bf16), w2_ref[...], preferred_element_type=f32)
    feats = jnp.maximum(feats + b2_ref[...], 0.0)                          # (tb, H)

    # Aux hidden layers: 128-aligned slices of the shared matmuls.
    ha = jnp.maximum(r_curr[:, h2:h2 + f_dim] + ba1_ref[...], 0.0)
    hb = jnp.maximum(r_curr[:, h2 + f_dim:] + r_goal[:, h2:] + bb1_ref[...], 0.0)

    # Size-1 heads via flipped contraction -> lane-dense (1, tb); row-wise stores,
    # scalar biases read from SMEM.
    dn = (((1,), (1,)), ((), ()))
    p1 = jax.lax.dot_general(wa2_ref[...], ha.astype(bf16), dn,
                             preferred_element_type=f32) + aux_b_ref[0]
    p2 = jax.lax.dot_general(wb2_ref[...], hb.astype(bf16), dn,
                             preferred_element_type=f32) + aux_b_ref[1]
    preds_ref[0:1, :] = p1.astype(preds_ref.dtype)
    preds_ref[1:2, :] = p2.astype(preds_ref.dtype)

    # ---- RNNStateEncoder single LSTM step (mask-reset hidden state) ----
    mask = mask_ref[...]                                                   # (tb, 1) f32
    h_prev = hc_in_ref[0] * mask
    c_prev = hc_in_ref[1] * mask

    # idx = ((prev_actions.float() + 1) * masks).long(); embedding table folded into emb_w.
    idx = ((pa_ref[...].astype(f32) + 1.0) * mask).astype(jnp.int32)       # (tb, 1)
    cols = jax.lax.broadcasted_iota(jnp.int32, (tb, n_emb), 1)
    onehot = (cols == idx).astype(f32)                                     # (tb, n_emb_pad)

    gates = jnp.dot(onehot, emb_w_ref[...], preferred_element_type=f32)    # (tb, 4H)
    gates = gates + jnp.dot(feats.astype(bf16), wih_f_ref[...], preferred_element_type=f32)
    gates = gates + jnp.dot(h_prev.astype(bf16), whh_ref[...], preferred_element_type=f32)
    gates = gates + b_lstm_ref[...]

    # Gate columns pre-permuted to [i, f, o | g]: one contiguous sigmoid, one tanh.
    sg = jax.nn.sigmoid(gates[:, :3 * hidden])
    g_g = jnp.tanh(gates[:, 3 * hidden:])
    i_g = sg[:, :hidden]
    f_g = sg[:, hidden:2 * hidden]
    o_g = sg[:, 2 * hidden:]

    c_new = f_g * c_prev + i_g * g_g
    h_new = o_g * jnp.tanh(c_new)
    hc_out_ref[0, :, :] = h_new.astype(hc_out_ref.dtype)
    hc_out_ref[1, :, :] = c_new.astype(hc_out_ref.dtype)


# ---------------------------------------------------------------------------
# Wrapper
# ---------------------------------------------------------------------------
def _perm_gates(w):
    """Reorder the last-dim LSTM gate blocks from PyTorch's [i, f, g, o] to [i, f, o, g]."""
    h = w.shape[-1] // 4
    return jnp.concatenate([w[..., :2 * h], w[..., 3 * h:], w[..., 2 * h:3 * h]], axis=-1)


def _pick_batch_tile(batch):
    # Tile must be a multiple of 128 whenever grid > 1 (lane-dense (2, B) aux output block);
    # >= 2 grid steps lets dimension_semantics=("parallel",) shard batch over v7x's 2 TCs.
    # TODO(synk): large batches not divisible by 128 fall back to a single full-batch tile.
    for tile in (1024, 512, 256, 128):
        if batch % tile == 0 and batch // tile >= 2:
            return tile
    return batch


def cnn_lstm_net_forward(params, observations, rnn_hidden_states, prev_actions, masks,
                         env_global_node=None):
    # TODO(synk): ResNetEncoder / Perception internals are not part of the spec; their outputs
    # (curr_context, goal_context, curr_embedding) are consumed as precomputed features, and
    # new_env_global_node / ffeatures are passed through.
    bf16 = jnp.bfloat16
    f32 = jnp.float32
    curr = observations["curr_context"]
    goal = observations["goal_context"]
    emb = observations["curr_embedding"]
    batch, f_dim = curr.shape
    hidden = params["visual_fc.2.weight"].shape[0]

    # ---- one-time layout plumbing (all transposes / concats / casts happen here, never in-kernel)
    w1t = params["visual_fc.0.weight"].T                                  # (3F, 2H)
    w1c, w1g, w1e = w1t[:f_dim], w1t[f_dim:2 * f_dim], w1t[2 * f_dim:]
    wa1t = params["pred_aux1.0.weight"].T                                 # (F, F)
    wb1t = params["pred_aux2.0.weight"].T                                 # (2F, F)
    wb1c, wb1g = wb1t[:f_dim], wb1t[f_dim:]
    w_curr = jnp.concatenate([w1c, wa1t, wb1c], axis=1).astype(bf16)      # (F, 2H+2F)
    w_goal = jnp.concatenate([w1g, wb1g], axis=1).astype(bf16)            # (F, 2H+F)
    w_emb = w1e.astype(bf16)                                              # (F, 2H)
    b1 = params["visual_fc.0.bias"].reshape(1, -1).astype(f32)
    ba1 = params["pred_aux1.0.bias"].reshape(1, -1).astype(f32)
    bb1 = params["pred_aux2.0.bias"].reshape(1, -1).astype(f32)
    w2 = params["visual_fc.2.weight"].T.astype(bf16)                      # (2H, H)
    b2 = params["visual_fc.2.bias"].reshape(1, -1).astype(f32)
    wa2 = params["pred_aux1.2.weight"].astype(bf16)                       # (1, F)
    wb2 = params["pred_aux2.2.weight"].astype(bf16)                       # (1, F)
    aux_b = jnp.concatenate([params["pred_aux1.2.bias"],
                             params["pred_aux2.2.bias"]]).astype(f32)     # (2,) -> SMEM

    # LSTM weights: transpose once, permute gate columns [i,f,g,o] -> [i,f,o,g], fold the
    # prev-action embedding table into W_ih's embedding slice.
    wih_t = _perm_gates(params["lstm.weight_ih_l0"].T)                    # (H+E, 4H)
    wih_f = wih_t[:hidden].astype(bf16)                                   # (H, 4H)
    wih_e = wih_t[hidden:]                                                # (E, 4H) f32
    whh = _perm_gates(params["lstm.weight_hh_l0"].T).astype(bf16)         # (H, 4H)
    b_lstm = _perm_gates((params["lstm.bias_ih_l0"]
                          + params["lstm.bias_hh_l0"]).reshape(1, -1)).astype(f32)
    table = params["prev_action_embedding.weight"]                        # (A+1, E)
    emb_w = jnp.dot(table, wih_e, precision=jax.lax.Precision.HIGHEST).astype(f32)
    n_emb = emb_w.shape[0]
    pad = (-n_emb) % 8
    if pad:                                                               # sublane multiple
        emb_w = jnp.pad(emb_w, ((0, pad), (0, 0)))

    masks_f = masks.astype(f32)
    prev_idx = prev_actions.astype(jnp.int32)

    tb = _pick_batch_tile(batch)
    assert batch % tb == 0
    grid = (batch // tb,)

    act = pl.BlockSpec((tb, f_dim), lambda i: (i, 0))
    col = pl.BlockSpec((tb, 1), lambda i: (i, 0))
    hc_blk = pl.BlockSpec((2, tb, hidden), lambda i: (0, i, 0))
    pin = lambda shape: pl.BlockSpec(shape, lambda i: (0, 0))

    preds, new_hidden = pl.pallas_call(
        _cnn_lstm_fused_kernel,
        out_shape=(jax.ShapeDtypeStruct((2, batch), jnp.float32),
                   jax.ShapeDtypeStruct((2, batch, hidden), rnn_hidden_states.dtype)),
        grid=grid,
        in_specs=[
            act, act, act, col, col, hc_blk,
            pin(w_curr.shape), pin(w_goal.shape), pin(w_emb.shape),
            pin(b1.shape), pin(ba1.shape), pin(bb1.shape),
            pin(w2.shape), pin(b2.shape), pin(wa2.shape), pin(wb2.shape),
            pl.BlockSpec(memory_space=pltpu.MemorySpace.SMEM),
            pin(emb_w.shape), pin(wih_f.shape), pin(whh.shape), pin(b_lstm.shape),
        ],
        out_specs=(pl.BlockSpec((2, tb), lambda i: (0, i)),
                   hc_blk),
        compiler_params=pltpu.CompilerParams(
            dimension_semantics=("parallel",),
            vmem_limit_bytes=_VMEM_LIMIT),
    )(curr, goal, emb, prev_idx, masks_f, rnn_hidden_states,
      w_curr, w_goal, w_emb, b1, ba1, bb1, w2, b2, wa2, wb2, aux_b,
      emb_w, wih_f, whh, b_lstm)

    # new_hidden == cat((h, c), dim=0); x is the LSTM output == new_hidden[0].
    x = new_hidden[0]
    pred1 = preds[0].reshape(batch, 1)
    pred2 = preds[1].reshape(batch, 1)
    return x, new_hidden, (pred1, pred2), env_global_node, None


# ---------------------------------------------------------------------------
# Parameters + pure-JAX reference (for correctness checking)
# ---------------------------------------------------------------------------
def init_params(key, f_dim, hidden, emb_dim, num_actions):
    ks = jax.random.split(key, 10)

    def linear(k, out_f, in_f):
        kw, kb = jax.random.split(k)
        bound = 1.0 / (in_f ** 0.5)
        w = jax.random.uniform(kw, (out_f, in_f), jnp.float32, -bound, bound)
        b = jax.random.uniform(kb, (out_f,), jnp.float32, -bound, bound)
        return w, b

    p = {}
    p["visual_fc.0.weight"], p["visual_fc.0.bias"] = linear(ks[0], 2 * hidden, 3 * f_dim)
    p["visual_fc.2.weight"], p["visual_fc.2.bias"] = linear(ks[1], hidden, 2 * hidden)
    p["pred_aux1.0.weight"], p["pred_aux1.0.bias"] = linear(ks[2], f_dim, f_dim)
    p["pred_aux1.2.weight"], p["pred_aux1.2.bias"] = linear(ks[3], 1, f_dim)
    p["pred_aux2.0.weight"], p["pred_aux2.0.bias"] = linear(ks[4], f_dim, 2 * f_dim)
    p["pred_aux2.2.weight"], p["pred_aux2.2.bias"] = linear(ks[5], 1, f_dim)
    p["prev_action_embedding.weight"] = jax.random.normal(
        ks[6], (num_actions + 1, emb_dim), jnp.float32)
    p["lstm.weight_ih_l0"], p["lstm.bias_ih_l0"] = linear(ks[7], 4 * hidden, hidden + emb_dim)
    p["lstm.weight_hh_l0"], p["lstm.bias_hh_l0"] = linear(ks[8], 4 * hidden, hidden)
    return p


def reference_forward(params, observations, rnn_hidden_states, prev_actions, masks):
    hi = jax.lax.Precision.HIGHEST
    relu = jax.nn.relu
    curr = observations["curr_context"]
    goal = observations["goal_context"]
    emb = observations["curr_embedding"]
    contexts = jnp.concatenate([curr, goal], axis=-1)
    x3 = jnp.concatenate([contexts, emb], axis=-1)

    h1 = relu(jnp.dot(x3, params["visual_fc.0.weight"].T, precision=hi)
              + params["visual_fc.0.bias"])
    feats = relu(jnp.dot(h1, params["visual_fc.2.weight"].T, precision=hi)
                 + params["visual_fc.2.bias"])
    pred1 = jnp.dot(relu(jnp.dot(curr, params["pred_aux1.0.weight"].T, precision=hi)
                         + params["pred_aux1.0.bias"]),
                    params["pred_aux1.2.weight"].T, precision=hi) + params["pred_aux1.2.bias"]
    pred2 = jnp.dot(relu(jnp.dot(contexts, params["pred_aux2.0.weight"].T, precision=hi)
                         + params["pred_aux2.0.bias"]),
                    params["pred_aux2.2.weight"].T, precision=hi) + params["pred_aux2.2.bias"]

    idx = ((prev_actions.astype(jnp.float32) + 1.0) * masks).astype(jnp.int32)[:, 0]
    act_emb = params["prev_action_embedding.weight"][idx]
    x_in = jnp.concatenate([feats, act_emb], axis=-1)

    hidden = feats.shape[-1]
    h0 = rnn_hidden_states[0] * masks
    c0 = rnn_hidden_states[1] * masks
    gates = (jnp.dot(x_in, params["lstm.weight_ih_l0"].T, precision=hi)
             + params["lstm.bias_ih_l0"]
             + jnp.dot(h0, params["lstm.weight_hh_l0"].T, precision=hi)
             + params["lstm.bias_hh_l0"])
    i_g = jax.nn.sigmoid(gates[:, 0:hidden])
    f_g = jax.nn.sigmoid(gates[:, hidden:2 * hidden])
    g_g = jnp.tanh(gates[:, 2 * hidden:3 * hidden])
    o_g = jax.nn.sigmoid(gates[:, 3 * hidden:4 * hidden])
    c_new = f_g * c0 + i_g * g_g
    h_new = o_g * jnp.tanh(c_new)
    return h_new, jnp.stack([h_new, c_new], axis=0), (pred1, pred2)


def _run_and_check(key, params, batch, f_dim, hidden, num_actions):
    kc, kg, ke, ka, km, kh, kcell = jax.random.split(key, 7)
    observations = {
        "curr_context": jax.random.normal(kc, (batch, f_dim), jnp.float32),
        "goal_context": jax.random.normal(kg, (batch, f_dim), jnp.float32),
        "curr_embedding": jax.random.normal(ke, (batch, f_dim), jnp.float32),
    }
    prev_actions = jax.random.randint(ka, (batch, 1), 0, num_actions, dtype=jnp.int32)
    masks = (jax.random.uniform(km, (batch, 1)) > 0.25).astype(jnp.float32)
    rnn_hidden_states = jnp.stack([
        0.1 * jax.random.normal(kh, (batch, hidden), jnp.float32),
        0.1 * jax.random.normal(kcell, (batch, hidden), jnp.float32),
    ])

    fwd = jax.jit(cnn_lstm_net_forward)
    x, new_hidden, (pred1, pred2), _, _ = fwd(
        params, observations, rnn_hidden_states, prev_actions, masks)
    jax.block_until_ready((x, new_hidden, pred1, pred2))

    x_r, hid_r, (p1_r, p2_r) = reference_forward(
        params, observations, rnn_hidden_states, prev_actions, masks)

    assert x.shape == (batch, hidden) and new_hidden.shape == (2, batch, hidden)
    assert pred1.shape == (batch, 1) and pred2.shape == (batch, 1)
    tol = dict(atol=2e-2, rtol=2e-2)          # bf16 matmul weights vs f32 HIGHEST reference
    assert jnp.allclose(x, x_r, **tol)
    assert jnp.allclose(new_hidden, hid_r, **tol)
    assert jnp.allclose(pred1, p1_r, **tol)
    assert jnp.allclose(pred2, p2_r, **tol)


if __name__ == "__main__":
    F_DIM = 128      # cfg.features.visual_feature_dim
    HIDDEN = 128     # hidden_size
    EMB = 32         # prev-action embedding dim (hardcoded 32 in the module)
    NUM_ACTIONS = 6  # action_space.n

    root = jax.random.PRNGKey(0)
    kp, k_small, k_tiled = jax.random.split(root, 3)
    params = init_params(kp, F_DIM, HIDDEN, EMB, NUM_ACTIONS)

    _run_and_check(k_small, params, 8, F_DIM, HIDDEN, NUM_ACTIONS)     # grid=(1,)
    _run_and_check(k_tiled, params, 256, F_DIM, HIDDEN, NUM_ACTIONS)   # grid=(2,) tiled path

    print("KERNEL_OK")
</pallas_src>

<mosaic_0001>
module attributes {stable_mosaic.version = 11 : i64} {
  func.func @_cnn_lstm_fused_kernel(%arg0: i32, %arg1: memref<8x128xf32, #tpu.memory_space<vmem>>, %arg2: memref<8x128xf32, #tpu.memory_space<vmem>>, %arg3: memref<8x128xf32, #tpu.memory_space<vmem>>, %arg4: memref<8x1xi32, #tpu.memory_space<vmem>>, %arg5: memref<8x1xf32, #tpu.memory_space<vmem>>, %arg6: memref<2x8x128xf32, #tpu.memory_space<vmem>>, %arg7: memref<128x512xbf16, #tpu.memory_space<vmem>>, %arg8: memref<128x384xbf16, #tpu.memory_space<vmem>>, %arg9: memref<128x256xbf16, #tpu.memory_space<vmem>>, %arg10: memref<1x256xf32, #tpu.memory_space<vmem>>, %arg11: memref<1x128xf32, #tpu.memory_space<vmem>>, %arg12: memref<1x128xf32, #tpu.memory_space<vmem>>, %arg13: memref<256x128xbf16, #tpu.memory_space<vmem>>, %arg14: memref<1x128xf32, #tpu.memory_space<vmem>>, %arg15: memref<1x128xbf16, #tpu.memory_space<vmem>>, %arg16: memref<1x128xbf16, #tpu.memory_space<vmem>>, %arg17: memref<2xf32, #tpu.memory_space<smem>>, %arg18: memref<8x512xf32, #tpu.memory_space<vmem>>, %arg19: memref<128x512xbf16, #tpu.memory_space<vmem>>, %arg20: memref<128x512xbf16, #tpu.memory_space<vmem>>, %arg21: memref<1x512xf32, #tpu.memory_space<vmem>>, %arg22: memref<2x8xf32, #tpu.memory_space<vmem>>, %arg23: memref<2x8x128xf32, #tpu.memory_space<vmem>>) attributes {dimension_semantics = [#tpu.dimension_semantics<parallel>], iteration_bounds = array<i64: 1>, scalar_prefetch = 0 : i64, scratch_operands = 0 : i64, tpu.core_type = #tpu.core_type<tc>, window_params = [{transform_indices = @transform_0, window_bounds = array<i64: 8, 128>}, {transform_indices = @transform_1, window_bounds = array<i64: 8, 128>}, {transform_indices = @transform_2, window_bounds = array<i64: 8, 128>}, {transform_indices = @transform_3, window_bounds = array<i64: 8, 1>}, {transform_indices = @transform_4, window_bounds = array<i64: 8, 1>}, {transform_indices = @transform_5, window_bounds = array<i64: 2, 8, 128>}, {pipeline_mode = #tpu.pipeline_mode<synchronous>, transform_indices = @transform_6, window_bounds = array<i64: 128, 512>}, {pipeline_mode = #tpu.pipeline_mode<synchronous>, transform_indices = @transform_7, window_bounds = array<i64: 128, 384>}, {pipeline_mode = #tpu.pipeline_mode<synchronous>, transform_indices = @transform_8, window_bounds = array<i64: 128, 256>}, {pipeline_mode = #tpu.pipeline_mode<synchronous>, transform_indices = @transform_9, window_bounds = array<i64: 1, 256>}, {pipeline_mode = #tpu.pipeline_mode<synchronous>, transform_indices = @transform_10, window_bounds = array<i64: 1, 128>}, {pipeline_mode = #tpu.pipeline_mode<synchronous>, transform_indices = @transform_11, window_bounds = array<i64: 1, 128>}, {pipeline_mode = #tpu.pipeline_mode<synchronous>, transform_indices = @transform_12, window_bounds = array<i64: 256, 128>}, {pipeline_mode = #tpu.pipeline_mode<synchronous>, transform_indices = @transform_13, window_bounds = array<i64: 1, 128>}, {pipeline_mode = #tpu.pipeline_mode<synchronous>, transform_indices = @transform_14, window_bounds = array<i64: 1, 128>}, {pipeline_mode = #tpu.pipeline_mode<synchronous>, transform_indices = @transform_15, window_bounds = array<i64: 1, 128>}, {transform_indices = @transform_16, window_bounds = array<i64: 2>}, {pipeline_mode = #tpu.pipeline_mode<synchronous>, transform_indices = @transform_17, window_bounds = array<i64: 8, 512>}, {pipeline_mode = #tpu.pipeline_mode<synchronous>, transform_indices = @transform_18, window_bounds = array<i64: 128, 512>}, {pipeline_mode = #tpu.pipeline_mode<synchronous>, transform_indices = @transform_19, window_bounds = array<i64: 128, 512>}, {pipeline_mode = #tpu.pipeline_mode<synchronous>, transform_indices = @transform_20, window_bounds = array<i64: 1, 512>}, {transform_indices = @transform_21, window_bounds = array<i64: 2, 8>}, {transform_indices = @transform_22, window_bounds = array<i64: 2, 8, 128>}]} {
    %c0 = arith.constant 0 : index
    %c0_0 = arith.constant 0 : index
    %0 = vector.load %arg1[%c0, %c0_0] : memref<8x128xf32, #tpu.memory_space<vmem>>, vector<8x128xf32>
    %1 = arith.truncf %0 : vector<8x128xf32> to vector<8x128xbf16>
    %c0_1 = arith.constant 0 : index
    %c0_2 = arith.constant 0 : index
    %2 = vector.load %arg2[%c0_1, %c0_2] : memref<8x128xf32, #tpu.memory_space<vmem>>, vector<8x128xf32>
    %3 = arith.truncf %2 : vector<8x128xf32> to vector<8x128xbf16>
    %c0_3 = arith.constant 0 : index
    %c0_4 = arith.constant 0 : index
    %4 = vector.load %arg3[%c0_3, %c0_4] : memref<8x128xf32, #tpu.memory_space<vmem>>, vector<8x128xf32>
    %5 = arith.truncf %4 : vector<8x128xf32> to vector<8x128xbf16>
    %c0_5 = arith.constant 0 : index
    %c0_6 = arith.constant 0 : index
    %6 = vector.load %arg7[%c0_5, %c0_6] : memref<128x512xbf16, #tpu.memory_space<vmem>>, vector<128x512xbf16>
    %cst = arith.constant dense<0.000000e+00> : vector<8x512xf32>
    %7 = tpu.matmul %1, %6, %cst {dimension_numbers = #tpu.dot_dimension_numbers<[1], [0], [0], [1], [0, 0, 1, 1], [], []>} : vector<8x128xbf16>, vector<128x512xbf16>, vector<8x512xf32> -> vector<8x512xf32>
    %c0_7 = arith.constant 0 : index
    %c0_8 = arith.constant 0 : index
    %8 = vector.load %arg8[%c0_7, %c0_8] : memref<128x384xbf16, #tpu.memory_space<vmem>>, vector<128x384xbf16>
    %cst_9 = arith.constant dense<0.000000e+00> : vector<8x384xf32>
    %9 = tpu.matmul %3, %8, %cst_9 {dimension_numbers = #tpu.dot_dimension_numbers<[1], [0], [0], [1], [0, 0, 1, 1], [], []>} : vector<8x128xbf16>, vector<128x384xbf16>, vector<8x384xf32> -> vector<8x384xf32>
    %c0_10 = arith.constant 0 : index
    %c0_11 = arith.constant 0 : index
    %10 = vector.load %arg9[%c0_10, %c0_11] : memref<128x256xbf16, #tpu.memory_space<vmem>>, vector<128x256xbf16>
    %cst_12 = arith.constant dense<0.000000e+00> : vector<8x256xf32>
    %11 = tpu.matmul %5, %10, %cst_12 {dimension_numbers = #tpu.dot_dimension_numbers<[1], [0], [0], [1], [0, 0, 1, 1], [], []>} : vector<8x128xbf16>, vector<128x256xbf16>, vector<8x256xf32> -> vector<8x256xf32>
    %12 = vector.extract_strided_slice %7 {offsets = [0, 0], sizes = [8, 256], strides = [1, 1]} : vector<8x512xf32> to vector<8x256xf32>
    %13 = vector.extract_strided_slice %9 {offsets = [0, 0], sizes = [8, 256], strides = [1, 1]} : vector<8x384xf32> to vector<8x256xf32>
    %14 = arith.addf %12, %13 : vector<8x256xf32>
    %15 = arith.addf %14, %11 : vector<8x256xf32>
    %c0_13 = arith.constant 0 : index
    %c0_14 = arith.constant 0 : index
    %16 = vector.load %arg10[%c0_13, %c0_14] : memref<1x256xf32, #tpu.memory_space<vmem>>, vector<1x256xf32>
    %17 = vector.broadcast %16 : vector<1x256xf32> to vector<8x256xf32>
    %18 = arith.addf %15, %17 : vector<8x256xf32>
    %cst_15 = arith.constant 0.000000e+00 : f32
    %19 = vector.broadcast %cst_15 : f32 to vector<8x256xf32>
    %20 = arith.maximumf %18, %19 : vector<8x256xf32>
    %21 = arith.truncf %20 : vector<8x256xf32> to vector<8x256xbf16>
    %c0_16 = arith.constant 0 : index
    %c0_17 = arith.constant 0 : index
    %22 = vector.load %arg13[%c0_16, %c0_17] : memref<256x128xbf16, #tpu.memory_space<vmem>>, vector<256x128xbf16>
    %cst_18 = arith.constant dense<0.000000e+00> : vector<8x128xf32>
    %23 = tpu.matmul %21, %22, %cst_18 {dimension_numbers = #tpu.dot_dimension_numbers<[1], [0], [0], [1], [0, 0, 1, 1], [], []>} : vector<8x256xbf16>, vector<256x128xbf16>, vector<8x128xf32> -> vector<8x128xf32>
    %c0_19 = arith.constant 0 : index
    %c0_20 = arith.constant 0 : index
    %24 = vector.load %arg14[%c0_19, %c0_20] : memref<1x128xf32, #tpu.memory_space<vmem>>, vector<1x128xf32>
    %25 = vector.broadcast %24 : vector<1x128xf32> to vector<8x128xf32>
    %26 = arith.addf %23, %25 : vector<8x128xf32>
    %cst_21 = arith.constant 0.000000e+00 : f32
    %27 = vector.broadcast %cst_21 : f32 to vector<8x128xf32>
    %28 = arith.maximumf %26, %27 : vector<8x128xf32>
    %29 = vector.extract_strided_slice %7 {offsets = [0, 256], sizes = [8, 128], strides = [1, 1]} : vector<8x512xf32> to vector<8x128xf32>
    %c0_22 = arith.constant 0 : index
    %c0_23 = arith.constant 0 : index
    %30 = vector.load %arg11[%c0_22, %c0_23] : memref<1x128xf32, #tpu.memory_space<vmem>>, vector<1x128xf32>
    %31 = vector.broadcast %30 : vector<1x128xf32> to vector<8x128xf32>
    %32 = arith.addf %29, %31 : vector<8x128xf32>
    %cst_24 = arith.constant 0.000000e+00 : f32
    %33 = vector.broadcast %cst_24 : f32 to vector<8x128xf32>
    %34 = arith.maximumf %32, %33 : vector<8x128xf32>
    %35 = vector.extract_strided_slice %7 {offsets = [0, 384], sizes = [8, 128], strides = [1, 1]} : vector<8x512xf32> to vector<8x128xf32>
    %36 = vector.extract_strided_slice %9 {offsets = [0, 256], sizes = [8, 128], strides = [1, 1]} : vector<8x384xf32> to vector<8x128xf32>
    %37 = arith.addf %35, %36 : vector<8x128xf32>
    %c0_25 = arith.constant 0 : index
    %c0_26 = arith.constant 0 : index
    %38 = vector.load %arg12[%c0_25, %c0_26] : memref<1x128xf32, #tpu.memory_space<vmem>>, vector<1x128xf32>
    %39 = vector.broadcast %38 : vector<1x128xf32> to vector<8x128xf32>
    %40 = arith.addf %37, %39 : vector<8x128xf32>
    %cst_27 = arith.constant 0.000000e+00 : f32
    %41 = vector.broadcast %cst_27 : f32 to vector<8x128xf32>
    %42 = arith.maximumf %40, %41 : vector<8x128xf32>
    %c0_28 = arith.constant 0 : index
    %c0_29 = arith.constant 0 : index
    %43 = vector.load %arg15[%c0_28, %c0_29] : memref<1x128xbf16, #tpu.memory_space<vmem>>, vector<1x128xbf16>
    %44 = arith.truncf %34 : vector<8x128xf32> to vector<8x128xbf16>
    %cst_30 = arith.constant dense<0.000000e+00> : vector<1x8xf32>
    %45 = tpu.matmul %43, %44, %cst_30 {dimension_numbers = #tpu.dot_dimension_numbers<[1], [1], [0], [0], [0, 0, 1, 0], [], []>} : vector<1x128xbf16>, vector<8x128xbf16>, vector<1x8xf32> -> vector<1x8xf32>
    %c0_31 = arith.constant 0 : index
    %46 = memref.load %arg17[%c0_31] : memref<2xf32, #tpu.memory_space<smem>>
    %47 = vector.broadcast %46 : f32 to vector<1x8xf32>
    %48 = arith.addf %45, %47 : vector<1x8xf32>
    %c0_32 = arith.constant 0 : index
    %c0_33 = arith.constant 0 : index
    %49 = vector.load %arg16[%c0_32, %c0_33] : memref<1x128xbf16, #tpu.memory_space<vmem>>, vector<1x128xbf16>
    %50 = arith.truncf %42 : vector<8x128xf32> to vector<8x128xbf16>
    %cst_34 = arith.constant dense<0.000000e+00> : vector<1x8xf32>
    %51 = tpu.matmul %49, %50, %cst_34 {dimension_numbers = #tpu.dot_dimension_numbers<[1], [1], [0], [0], [0, 0, 1, 0], [], []>} : vector<1x128xbf16>, vector<8x128xbf16>, vector<1x8xf32> -> vector<1x8xf32>
    %c1 = arith.constant 1 : index
    %52 = memref.load %arg17[%c1] : memref<2xf32, #tpu.memory_space<smem>>
    %53 = vector.broadcast %52 : f32 to vector<1x8xf32>
    %54 = arith.addf %51, %53 : vector<1x8xf32>
    %c0_35 = arith.constant 0 : index
    %c0_36 = arith.constant 0 : index
    %55 = vector.load %arg22[%c0_35, %c0_36] : memref<2x8xf32, #tpu.memory_space<vmem>>, vector<1x8xf32>
    tpu.vector_store %arg22[%c0_35, %c0_36], %48 {strides = array<i32>} : memref<2x8xf32, #tpu.memory_space<vmem>>, vector<1x8xf32>,
    %c1_37 = arith.constant 1 : index
    %c0_38 = arith.constant 0 : index
    %56 = vector.load %arg22[%c1_37, %c0_38] : memref<2x8xf32, #tpu.memory_space<vmem>>, vector<1x8xf32>
    tpu.vector_store %arg22[%c1_37, %c0_38], %54 {strides = array<i32>} : memref<2x8xf32, #tpu.memory_space<vmem>>, vector<1x8xf32>,
    %c0_39 = arith.constant 0 : index
    %c0_40 = arith.constant 0 : index
    %57 = vector.load %arg5[%c0_39, %c0_40] : memref<8x1xf32, #tpu.memory_space<vmem>>, vector<8x1xf32>
    %c0_41 = arith.constant 0 : index
    %c0_42 = arith.constant 0 : index
    %c0_43 = arith.constant 0 : index
    %58 = vector.load %arg6[%c0_41, %c0_42, %c0_43] : memref<2x8x128xf32, #tpu.memory_space<vmem>>, vector<1x8x128xf32>
    %59 = vector.shape_cast %58 : vector<1x8x128xf32> to vector<8x128xf32>
    %60 = vector.broadcast %57 : vector<8x1xf32> to vector<8x128xf32>
    %61 = arith.mulf %59, %60 : vector<8x128xf32>
    %c1_44 = arith.constant 1 : index
    %c0_45 = arith.constant 0 : index
    %c0_46 = arith.constant 0 : index
    %62 = vector.load %arg6[%c1_44, %c0_45, %c0_46] : memref<2x8x128xf32, #tpu.memory_space<vmem>>, vector<1x8x128xf32>
    %63 = vector.shape_cast %62 : vector<1x8x128xf32> to vector<8x128xf32>
    %64 = vector.broadcast %57 : vector<8x1xf32> to vector<8x128xf32>
    %65 = arith.mulf %63, %64 : vector<8x128xf32>
    %c0_47 = arith.constant 0 : index
    %c0_48 = arith.constant 0 : index
    %66 = vector.load %arg4[%c0_47, %c0_48] : memref<8x1xi32, #tpu.memory_space<vmem>>, vector<8x1xi32>
    %67 = arith.sitofp %66 : vector<8x1xi32> to vector<8x1xf32>
    %cst_49 = arith.constant 1.000000e+00 : f32
    %68 = vector.broadcast %cst_49 : f32 to vector<8x1xf32>
    %69 = arith.addf %67, %68 : vector<8x1xf32>
    %70 = arith.mulf %69, %57 : vector<8x1xf32>
    %71 = arith.fptosi %70 : vector<8x1xf32> to vector<8x1xi32>
    %72 = tpu.iota {dimensions = array<i32: 1>} : vector<8x8xi32>
    %73 = vector.broadcast %71 : vector<8x1xi32> to vector<8x8xi32>
    %74 = arith.cmpi eq, %72, %73 : vector<8x8xi32>
    %75 = arith.extui %74 : vector<8x8xi1> to vector<8x8xi32>
    %76 = arith.sitofp %75 : vector<8x8xi32> to vector<8x8xf32>
    %c0_50 = arith.constant 0 : index
    %c0_51 = arith.constant 0 : index
    %77 = vector.load %arg18[%c0_50, %c0_51] : memref<8x512xf32, #tpu.memory_space<vmem>>, vector<8x512xf32>
    %cst_52 = arith.constant dense<0.000000e+00> : vector<8x512xf32>
    %78 = tpu.matmul %76, %77, %cst_52 {dimension_numbers = #tpu.dot_dimension_numbers<[1], [0], [0], [1], [0, 0, 1, 1], [], []>} : vector<8x8xf32>, vector<8x512xf32>, vector<8x512xf32> -> vector<8x512xf32>
    %79 = arith.truncf %28 : vector<8x128xf32> to vector<8x128xbf16>
    %c0_53 = arith.constant 0 : index
    %c0_54 = arith.constant 0 : index
    %80 = vector.load %arg19[%c0_53, %c0_54] : memref<128x512xbf16, #tpu.memory_space<vmem>>, vector<128x512xbf16>
    %cst_55 = arith.constant dense<0.000000e+00> : vector<8x512xf32>
    %81 = tpu.matmul %79, %80, %cst_55 {dimension_numbers = #tpu.dot_dimension_numbers<[1], [0], [0], [1], [0, 0, 1, 1], [], []>} : vector<8x128xbf16>, vector<128x512xbf16>, vector<8x512xf32> -> vector<8x512xf32>
    %82 = arith.addf %78, %81 : vector<8x512xf32>
    %83 = arith.truncf %61 : vector<8x128xf32> to vector<8x128xbf16>
    %c0_56 = arith.constant 0 : index
    %c0_57 = arith.constant 0 : index
    %84 = vector.load %arg20[%c0_56, %c0_57] : memref<128x512xbf16, #tpu.memory_space<vmem>>, vector<128x512xbf16>
    %cst_58 = arith.constant dense<0.000000e+00> : vector<8x512xf32>
    %85 = tpu.matmul %83, %84, %cst_58 {dimension_numbers = #tpu.dot_dimension_numbers<[1], [0], [0], [1], [0, 0, 1, 1], [], []>} : vector<8x128xbf16>, vector<128x512xbf16>, vector<8x512xf32> -> vector<8x512xf32>
    %86 = arith.addf %82, %85 : vector<8x512xf32>
    %c0_59 = arith.constant 0 : index
    %c0_60 = arith.constant 0 : index
    %87 = vector.load %arg21[%c0_59, %c0_60] : memref<1x512xf32, #tpu.memory_space<vmem>>, vector<1x512xf32>
    %88 = vector.broadcast %87 : vector<1x512xf32> to vector<8x512xf32>
    %89 = arith.addf %86, %88 : vector<8x512xf32>
    %90 = vector.extract_strided_slice %89 {offsets = [0, 0], sizes = [8, 384], strides = [1, 1]} : vector<8x512xf32> to vector<8x384xf32>
    %91 = arith.negf %90 : vector<8x384xf32>
    %92 = math.exp %91 : vector<8x384xf32>
    %cst_61 = arith.constant 1.000000e+00 : f32
    %93 = vector.broadcast %cst_61 : f32 to vector<8x384xf32>
    %94 = arith.addf %93, %92 : vector<8x384xf32>
    %95 = arith.divf %93, %94 : vector<8x384xf32>
    %96 = vector.extract_strided_slice %89 {offsets = [0, 384], sizes = [8, 128], strides = [1, 1]} : vector<8x512xf32> to vector<8x128xf32>
    %97 = math.tanh %96 : vector<8x128xf32>
    %98 = vector.extract_strided_slice %95 {offsets = [0, 0], sizes = [8, 128], strides = [1, 1]} : vector<8x384xf32> to vector<8x128xf32>
    %99 = vector.extract_strided_slice %95 {offsets = [0, 128], sizes = [8, 128], strides = [1, 1]} : vector<8x384xf32> to vector<8x128xf32>
    %100 = vector.extract_strided_slice %95 {offsets = [0, 256], sizes = [8, 128], strides = [1, 1]} : vector<8x384xf32> to vector<8x128xf32>
    %101 = arith.mulf %99, %65 : vector<8x128xf32>
    %102 = arith.mulf %98, %97 : vector<8x128xf32>
    %103 = arith.addf %101, %102 : vector<8x128xf32>
    %104 = math.tanh %103 : vector<8x128xf32>
    %105 = arith.mulf %100, %104 : vector<8x128xf32>
    %c0_62 = arith.constant 0 : index
    %c0_63 = arith.constant 0 : index
    %c0_64 = arith.constant 0 : index
    %106 = vector.load %arg23[%c0_62, %c0_63, %c0_64] : memref<2x8x128xf32, #tpu.memory_space<vmem>>, vector<1x8x128xf32>
    %107 = vector.shape_cast %106 : vector<1x8x128xf32> to vector<8x128xf32>
    %108 = vector.shape_cast %105 : vector<8x128xf32> to vector<1x8x128xf32>
    tpu.vector_store %arg23[%c0_62, %c0_63, %c0_64], %108 {strides = array<i32>} : memref<2x8x128xf32, #tpu.memory_space<vmem>>, vector<1x8x128xf32>,
    %c1_65 = arith.constant 1 : index
    %c0_66 = arith.constant 0 : index
    %c0_67 = arith.constant 0 : index
    %109 = vector.load %arg23[%c1_65, %c0_66, %c0_67] : memref<2x8x128xf32, #tpu.memory_space<vmem>>, vector<1x8x128xf32>
    %110 = vector.shape_cast %109 : vector<1x8x128xf32> to vector<8x128xf32>
    %111 = vector.shape_cast %103 : vector<8x128xf32> to vector<1x8x128xf32>
    tpu.vector_store %arg23[%c1_65, %c0_66, %c0_67], %111 {strides = array<i32>} : memref<2x8x128xf32, #tpu.memory_space<vmem>>, vector<1x8x128xf32>,
    return
  }
  func.func @transform_0(%arg0: i32) -> (i32, i32) {
    %c0_i32 = arith.constant 0 : i32
    %c0_i32_0 = arith.constant 0 : i32
    return %arg0, %c0_i32 : i32, i32
  }
  func.func @transform_1(%arg0: i32) -> (i32, i32) {
    %c0_i32 = arith.constant 0 : i32
    %c0_i32_0 = arith.constant 0 : i32
    return %arg0, %c0_i32 : i32, i32
  }
  func.func @transform_2(%arg0: i32) -> (i32, i32) {
    %c0_i32 = arith.constant 0 : i32
    %c0_i32_0 = arith.constant 0 : i32
    return %arg0, %c0_i32 : i32, i32
  }
  func.func @transform_3(%arg0: i32) -> (i32, i32) {
    %c0_i32 = arith.constant 0 : i32
    %c0_i32_0 = arith.constant 0 : i32
    return %arg0, %c0_i32 : i32, i32
  }
  func.func @transform_4(%arg0: i32) -> (i32, i32) {
    %c0_i32 = arith.constant 0 : i32
    %c0_i32_0 = arith.constant 0 : i32
    return %arg0, %c0_i32 : i32, i32
  }
  func.func @transform_5(%arg0: i32) -> (i32, i32, i32) {
    %c0_i32 = arith.constant 0 : i32
    %c0_i32_0 = arith.constant 0 : i32
    %c0_i32_1 = arith.constant 0 : i32
    return %c0_i32, %arg0, %c0_i32_0 : i32, i32, i32
  }
  func.func @transform_6(%arg0: i32) -> (i32, i32) {
    %c0_i32 = arith.constant 0 : i32
    %c0_i32_0 = arith.constant 0 : i32
    %c0_i32_1 = arith.constant 0 : i32
    return %c0_i32, %c0_i32_0 : i32, i32
  }
  func.func @transform_7(%arg0: i32) -> (i32, i32) {
    %c0_i32 = arith.constant 0 : i32
    %c0_i32_0 = arith.constant 0 : i32
    %c0_i32_1 = arith.constant 0 : i32
    return %c0_i32, %c0_i32_0 : i32, i32
  }
  func.func @transform_8(%arg0: i32) -> (i32, i32) {
    %c0_i32 = arith.constant 0 : i32
    %c0_i32_0 = arith.constant 0 : i32
    %c0_i32_1 = arith.constant 0 : i32
    return %c0_i32, %c0_i32_0 : i32, i32
  }
  func.func @transform_9(%arg0: i32) -> (i32, i32) {
    %c0_i32 = arith.constant 0 : i32
    %c0_i32_0 = arith.constant 0 : i32
    %c0_i32_1 = arith.constant 0 : i32
    return %c0_i32, %c0_i32_0 : i32, i32
  }
  func.func @transform_10(%arg0: i32) -> (i32, i32) {
    %c0_i32 = arith.constant 0 : i32
    %c0_i32_0 = arith.constant 0 : i32
    %c0_i32_1 = arith.constant 0 : i32
    return %c0_i32, %c0_i32_0 : i32, i32
  }
  func.func @transform_11(%arg0: i32) -> (i32, i32) {
    %c0_i32 = arith.constant 0 : i32
    %c0_i32_0 = arith.constant 0 : i32
    %c0_i32_1 = arith.constant 0 : i32
    return %c0_i32, %c0_i32_0 : i32, i32
  }
  func.func @transform_12(%arg0: i32) -> (i32, i32) {
    %c0_i32 = arith.constant 0 : i32
    %c0_i32_0 = arith.constant 0 : i32
    %c0_i32_1 = arith.constant 0 : i32
    return %c0_i32, %c0_i32_0 : i32, i32
  }
  func.func @transform_13(%arg0: i32) -> (i32, i32) {
    %c0_i32 = arith.constant 0 : i32
    %c0_i32_0 = arith.constant 0 : i32
    %c0_i32_1 = arith.constant 0 : i32
    return %c0_i32, %c0_i32_0 : i32, i32
  }
  func.func @transform_14(%arg0: i32) -> (i32, i32) {
    %c0_i32 = arith.constant 0 : i32
    %c0_i32_0 = arith.constant 0 : i32
    %c0_i32_1 = arith.constant 0 : i32
    return %c0_i32, %c0_i32_0 : i32, i32
  }
  func.func @transform_15(%arg0: i32) -> (i32, i32) {
    %c0_i32 = arith.constant 0 : i32
    %c0_i32_0 = arith.constant 0 : i32
    %c0_i32_1 = arith.constant 0 : i32
    return %c0_i32, %c0_i32_0 : i32, i32
  }
  func.func @transform_16(%arg0: i32) -> i32 {
    %c0_i32 = arith.constant 0 : i32
    %c0_i32_0 = arith.constant 0 : i32
    return %c0_i32 : i32
  }
  func.func @transform_17(%arg0: i32) -> (i32, i32) {
    %c0_i32 = arith.constant 0 : i32
    %c0_i32_0 = arith.constant 0 : i32
    %c0_i32_1 = arith.constant 0 : i32
    return %c0_i32, %c0_i32_0 : i32, i32
  }
  func.func @transform_18(%arg0: i32) -> (i32, i32) {
    %c0_i32 = arith.constant 0 : i32
    %c0_i32_0 = arith.constant 0 : i32
    %c0_i32_1 = arith.constant 0 : i32
    return %c0_i32, %c0_i32_0 : i32, i32
  }
  func.func @transform_19(%arg0: i32) -> (i32, i32) {
    %c0_i32 = arith.constant 0 : i32
    %c0_i32_0 = arith.constant 0 : i32
    %c0_i32_1 = arith.constant 0 : i32
    return %c0_i32, %c0_i32_0 : i32, i32
  }
  func.func @transform_20(%arg0: i32) -> (i32, i32) {
    %c0_i32 = arith.constant 0 : i32
    %c0_i32_0 = arith.constant 0 : i32
    %c0_i32_1 = arith.constant 0 : i32
    return %c0_i32, %c0_i32_0 : i32, i32
  }
  func.func @transform_21(%arg0: i32) -> (i32, i32) {
    %c0_i32 = arith.constant 0 : i32
    %c0_i32_0 = arith.constant 0 : i32
    return %c0_i32, %arg0 : i32, i32
  }
  func.func @transform_22(%arg0: i32) -> (i32, i32, i32) {
    %c0_i32 = arith.constant 0 : i32
    %c0_i32_0 = arith.constant 0 : i32
    %c0_i32_1 = arith.constant 0 : i32
    return %c0_i32, %arg0, %c0_i32_0 : i32, i32, i32
  }
}

</mosaic_0001>

<llo_original>
// kernel: cnn_lstm_net_forward.1
$region0: #{cnn_lstm_net_forward.1}
  #allocation0 [shape = 'u32[]', space=smem, size = 0x4, offset = 0x4, fixed_abs, tag = 'smem constant byte address 0x4 - core index']
  #allocation1 [shape = 'u32[72,128]{1,0:T(1,128)}', space=vmem, size = 0x9000, scoped, tag = 'internal scratch']
  %s0 = inlined_call_operand.vmem [shape: f32[8,128], index: 0, kind: input, shape index: {}]
  %s1 = inlined_call_operand.vmem [shape: f32[8,128], index: 1, kind: input, shape index: {}]
  %s2 = inlined_call_operand.vmem [shape: f32[8,128], index: 2, kind: input, shape index: {}]
  %s3 = inlined_call_operand.vmem [shape: s32[8,1], index: 3, kind: input, shape index: {}]
  %s4 = inlined_call_operand.vmem [shape: f32[8,1], index: 4, kind: input, shape index: {}]
  %s5 = inlined_call_operand.vmem [shape: f32[2,8,128], index: 5, kind: input, shape index: {}]
  %s6 = inlined_call_operand.vmem [shape: bf16[128,512], index: 6, kind: input, shape index: {}]
  %s7 = inlined_call_operand.vmem [shape: bf16[128,384], index: 7, kind: input, shape index: {}]
  %s8 = inlined_call_operand.vmem [shape: bf16[128,256], index: 8, kind: input, shape index: {}]
  %s9 = inlined_call_operand.vmem [shape: f32[1,256], index: 9, kind: input, shape index: {}]
  %s10 = inlined_call_operand.vmem [shape: f32[1,128], index: 10, kind: input, shape index: {}]
  %s11 = inlined_call_operand.vmem [shape: f32[1,128], index: 11, kind: input, shape index: {}]
  %s12 = inlined_call_operand.vmem [shape: bf16[256,128], index: 12, kind: input, shape index: {}]
  %s13 = inlined_call_operand.vmem [shape: f32[1,128], index: 13, kind: input, shape index: {}]
  %s14 = inlined_call_operand.vmem [shape: bf16[1,128], index: 14, kind: input, shape index: {}]
  %s15 = inlined_call_operand.vmem [shape: bf16[1,128], index: 15, kind: input, shape index: {}]
  %s16 = inlined_call_operand.vmem [shape: f32[2], index: 16, kind: input, shape index: {}]
  %s17 = inlined_call_operand.vmem [shape: f32[8,512], index: 17, kind: input, shape index: {}]
  %s18 = inlined_call_operand.vmem [shape: bf16[128,512], index: 18, kind: input, shape index: {}]
  %s19 = inlined_call_operand.vmem [shape: bf16[128,512], index: 19, kind: input, shape index: {}]
  %s20 = inlined_call_operand.vmem [shape: f32[1,512], index: 20, kind: input, shape index: {}]
  %s21 = inlined_call_operand.vmem [shape: f32[2,8], index: 21, kind: output, shape index: {0}]
  %s22 = inlined_call_operand.vmem [shape: f32[2,8,128], index: 22, kind: output, shape index: {1}]
  %23 = xla_tuple %s21, %s22
  %s24 = sld [smem:[#allocation0]]
  $region106: #{cnn_lstm_net_forward.1} parent=0
    _
  %s26 = ssub.s32 1, %s24
  %s27 = scalar_select 0, %s26, %s24
  $region1: #{cnn_lstm_net_forward.1} parent=0
    #allocation2 [shape = 'u8[512]{0}', space=smem, size = 0x200, scoped, tag = 'input window, operand 16, single buffered']
    #allocation3 [shape = 's32[1]{0}', space=sflag, size = 0x4, scoped, tag = 'scoped memory for cnn_lstm_net_forward.1']
    %28 = vsyncpa [#allocation3], 0
    // Predicated region
    $region2: #{cnn_lstm_net_forward.1} parent=1 // pred_check
      _
    $region3: #{cnn_lstm_net_forward.1} parent=1 // pred_check_branch
      %30 = sbr.rel (0) target = $region5
    $region4: #{cnn_lstm_net_forward.1} parent=1 // pred_region
      _
    $region5: #{cnn_lstm_net_forward.1} parent=1 // pred_fallthru
      _
    // Predicated region
    $region6: #{cnn_lstm_net_forward.1} parent=1 // pred_check
      _
    $region7: #{cnn_lstm_net_forward.1} parent=1 // pred_check_branch
      %32 = sbr.rel (0) target = $region9
    $region8: #{cnn_lstm_net_forward.1} parent=1 // pred_region
      _
    $region9: #{cnn_lstm_net_forward.1} parent=1 // pred_fallthru
      _
    // Predicated region
    $region10: #{cnn_lstm_net_forward.1} parent=1 // pred_check
      _
    $region11: #{cnn_lstm_net_forward.1} parent=1 // pred_check_branch
      %34 = sbr.rel (0) target = $region13
    $region12: #{cnn_lstm_net_forward.1} parent=1 // pred_region
      _
    $region13: #{cnn_lstm_net_forward.1} parent=1 // pred_fallthru
      _
    // Predicated region
    $region14: #{cnn_lstm_net_forward.1} parent=1 // pred_check
      _
    $region15: #{cnn_lstm_net_forward.1} parent=1 // pred_check_branch
      %36 = sbr.rel (0) target = $region17
    $region16: #{cnn_lstm_net_forward.1} parent=1 // pred_region
      _
    $region17: #{cnn_lstm_net_forward.1} parent=1 // pred_fallthru
      _
    // Predicated region
    $region18: #{cnn_lstm_net_forward.1} parent=1 // pred_check
      _
    $region19: #{cnn_lstm_net_forward.1} parent=1 // pred_check_branch
      %38 = sbr.rel (0) target = $region21
    $region20: #{cnn_lstm_net_forward.1} parent=1 // pred_region
      _
    $region21: #{cnn_lstm_net_forward.1} parent=1 // pred_fallthru
      _
    // Predicated region
    $region22: #{cnn_lstm_net_forward.1} parent=1 // pred_check
      _
    $region23: #{cnn_lstm_net_forward.1} parent=1 // pred_check_branch
      %40 = sbr.rel (0) target = $region25
    $region24: #{cnn_lstm_net_forward.1} parent=1 // pred_region
      _
    $region25: #{cnn_lstm_net_forward.1} parent=1 // pred_fallthru
      _
    // Predicated region
    $region26: #{cnn_lstm_net_forward.1} parent=1 // pred_check
      _
    $region27: #{cnn_lstm_net_forward.1} parent=1 // pred_check_branch
      %42 = sbr.rel (0) target = $region29
    $region28: #{cnn_lstm_net_forward.1} parent=1 // pred_region
      _
    $region29: #{cnn_lstm_net_forward.1} parent=1 // pred_fallthru
      _
    // Predicated region
    $region30: #{cnn_lstm_net_forward.1} parent=1 // pred_check
      _
    $region31: #{cnn_lstm_net_forward.1} parent=1 // pred_check_branch
      %44 = sbr.rel (0) target = $region33
    $region32: #{cnn_lstm_net_forward.1} parent=1 // pred_region
      _
    $region33: #{cnn_lstm_net_forward.1} parent=1 // pred_fallthru
      _
    // Predicated region
    $region34: #{cnn_lstm_net_forward.1} parent=1 // pred_check
      _
    $region35: #{cnn_lstm_net_forward.1} parent=1 // pred_check_branch
      %46 = sbr.rel (0) target = $region37
    $region36: #{cnn_lstm_net_forward.1} parent=1 // pred_region
      _
    $region37: #{cnn_lstm_net_forward.1} parent=1 // pred_fallthru
      _
    // Predicated region
    $region38: #{cnn_lstm_net_forward.1} parent=1 // pred_check
      _
    $region39: #{cnn_lstm_net_forward.1} parent=1 // pred_check_branch
      %48 = sbr.rel (0) target = $region41
    $region40: #{cnn_lstm_net_forward.1} parent=1 // pred_region
      _
    $region41: #{cnn_lstm_net_forward.1} parent=1 // pred_fallthru
      _
    // Predicated region
    $region42: #{cnn_lstm_net_forward.1} parent=1 // pred_check
      _
    $region43: #{cnn_lstm_net_forward.1} parent=1 // pred_check_branch
      %50 = sbr.rel (0) target = $region45
    $region44: #{cnn_lstm_net_forward.1} parent=1 // pred_region
      _
    $region45: #{cnn_lstm_net_forward.1} parent=1 // pred_fallthru
      _
    // Predicated region
    $region46: #{cnn_lstm_net_forward.1} parent=1 // pred_check
      _
    $region47: #{cnn_lstm_net_forward.1} parent=1 // pred_check_branch
      %52 = sbr.rel (0) target = $region49
    $region48: #{cnn_lstm_net_forward.1} parent=1 // pred_region
      _
    $region49: #{cnn_lstm_net_forward.1} parent=1 // pred_fallthru
      _
    // Predicated region
    $region50: #{cnn_lstm_net_forward.1} parent=1 // pred_check
      _
    $region51: #{cnn_lstm_net_forward.1} parent=1 // pred_check_branch
      %54 = sbr.rel (0) target = $region53
    $region52: #{cnn_lstm_net_forward.1} parent=1 // pred_region
      _
    $region53: #{cnn_lstm_net_forward.1} parent=1 // pred_fallthru
      _
    // Predicated region
    $region54: #{cnn_lstm_net_forward.1} parent=1 // pred_check
      _
    $region55: #{cnn_lstm_net_forward.1} parent=1 // pred_check_branch
      %56 = sbr.rel (0) target = $region57
    $region56: #{cnn_lstm_net_forward.1} parent=1 // pred_region
      _
    $region57: #{cnn_lstm_net_forward.1} parent=1 // pred_fallthru
      _
    // Predicated region
    $region58: #{cnn_lstm_net_forward.1} parent=1 // pred_check
      _
    $region59: #{cnn_lstm_net_forward.1} parent=1 // pred_check_branch
      %58 = sbr.rel (0) target = $region61
    $region60: #{cnn_lstm_net_forward.1} parent=1 // pred_region
      _
    $region61: #{cnn_lstm_net_forward.1} parent=1 // pred_fallthru
      _
    // Predicated region
    $region62: #{cnn_lstm_net_forward.1} parent=1 // pred_check
      _
    $region63: #{cnn_lstm_net_forward.1} parent=1 // pred_check_branch
      %60 = sbr.rel (0) target = $region65
    $region64: #{cnn_lstm_net_forward.1} parent=1 // pred_region
      _
    $region65: #{cnn_lstm_net_forward.1} parent=1 // pred_fallthru
      _
    // Predicated region
    $region66: #{cnn_lstm_net_forward.1} parent=1 // pred_check
      _
    $region67: #{cnn_lstm_net_forward.1} parent=1 // pred_check_branch
      %62 = sbr.rel (0) target = $region69
    $region68: #{cnn_lstm_net_forward.1} parent=1 // pred_region
      %64 = vsyncadd [#allocation3], 0
      %s66 = sshll.u32 %s16, 4
      %s67 = int_to_ptr.vmem [resolvable:$true] %s66
      %69 = dma.vmem_to_smem %s67, 16, [#allocation2], [#allocation3]
    $region69: #{cnn_lstm_net_forward.1} parent=1 // pred_fallthru
      _
    // Predicated region
    $region70: #{cnn_lstm_net_forward.1} parent=1 // pred_check
      _
    $region71: #{cnn_lstm_net_forward.1} parent=1 // pred_check_branch
      %71 = sbr.rel (0) target = $region73
    $region72: #{cnn_lstm_net_forward.1} parent=1 // pred_region
      _
    $region73: #{cnn_lstm_net_forward.1} parent=1 // pred_fallthru
      _
    // Predicated region
    $region74: #{cnn_lstm_net_forward.1} parent=1 // pred_check
      _
    $region75: #{cnn_lstm_net_forward.1} parent=1 // pred_check_branch
      %73 = sbr.rel (0) target = $region77
    $region76: #{cnn_lstm_net_forward.1} parent=1 // pred_region
      _
    $region77: #{cnn_lstm_net_forward.1} parent=1 // pred_fallthru
      _
    // Predicated region
    $region78: #{cnn_lstm_net_forward.1} parent=1 // pred_check
      _
    $region79: #{cnn_lstm_net_forward.1} parent=1 // pred_check_branch
      %75 = sbr.rel (0) target = $region81
    $region80: #{cnn_lstm_net_forward.1} parent=1 // pred_region
      _
    $region81: #{cnn_lstm_net_forward.1} parent=1 // pred_fallthru
      _
    // Predicated region
    $region82: #{cnn_lstm_net_forward.1} parent=1 // pred_check
      _
    $region83: #{cnn_lstm_net_forward.1} parent=1 // pred_check_branch
      %77 = sbr.rel (0) target = $region85
    $region84: #{cnn_lstm_net_forward.1} parent=1 // pred_region
      _
    $region85: #{cnn_lstm_net_forward.1} parent=1 // pred_fallthru
      _
    // Predicated region
    $region86: #{cnn_lstm_net_forward.1} parent=1 // pred_check
      _
    $region87: #{cnn_lstm_net_forward.1} parent=1 // pred_check_branch
      %79 = sbr.rel (0) target = $region89
    $region88: #{cnn_lstm_net_forward.1} parent=1 // pred_region
      %81 = dma.done [#allocation3], 16
    $region89: #{cnn_lstm_net_forward.1} parent=1 // pred_fallthru
      _
    %82 = sfence
    %v84 = vld [vmem:[%s0] sm:$0xff]
    %v85 = vpack.c.bf16 %v84, %v84
    %v86 = vld [vmem:[%s1] sm:$0xff]
    %v87 = vpack.c.bf16 %v86, %v86
    %v88 = vld [vmem:[%s2] sm:$0xff]
    %v89 = vpack.c.bf16 %v88, %v88
    %v90 = vld [vmem:[%s6] sm:$0xff]
    %v91 = vld [vmem:[%s6 + $0x8] sm:$0xff]
    %v92 = vld [vmem:[%s6 + $0x10] sm:$0xff]
    %v93 = vld [vmem:[%s6 + $0x18] sm:$0xff]
    %v94 = vld [vmem:[%s6 + $0x20] sm:$0xff]
    %v95 = vld [vmem:[%s6 + $0x28] sm:$0xff]
    %v96 = vld [vmem:[%s6 + $0x30] sm:$0xff]
    %v97 = vld [vmem:[%s6 + $0x38] sm:$0xff]
    %v98 = vld [vmem:[%s6 + $0x40] sm:$0xff]
    %v99 = vld [vmem:[%s6 + $0x48] sm:$0xff]
    %v100 = vld [vmem:[%s6 + $0x50] sm:$0xff]
    %v101 = vld [vmem:[%s6 + $0x58] sm:$0xff]
    %v102 = vld [vmem:[%s6 + $0x60] sm:$0xff]
    %v103 = vld [vmem:[%s6 + $0x68] sm:$0xff]
    %v104 = vld [vmem:[%s6 + $0x70] sm:$0xff]
    %v105 = vld [vmem:[%s6 + $0x78] sm:$0xff]
    %v106 = vld [vmem:[%s6 + $0x80] sm:$0xff]
    %v107 = vld [vmem:[%s6 + $0x88] sm:$0xff]
    %v108 = vld [vmem:[%s6 + $0x90] sm:$0xff]
    %v109 = vld [vmem:[%s6 + $0x98] sm:$0xff]
    %v110 = vld [vmem:[%s6 + $0xa0] sm:$0xff]
    %v111 = vld [vmem:[%s6 + $0xa8] sm:$0xff]
    %v112 = vld [vmem:[%s6 + $0xb0] sm:$0xff]
    %v113 = vld [vmem:[%s6 + $0xb8] sm:$0xff]
    %v114 = vld [vmem:[%s6 + $0xc0] sm:$0xff]
    %v115 = vld [vmem:[%s6 + $0xc8] sm:$0xff]
    %v116 = vld [vmem:[%s6 + $0xd0] sm:$0xff]
    %v117 = vld [vmem:[%s6 + $0xd8] sm:$0xff]
    %v118 = vld [vmem:[%s6 + $0xe0] sm:$0xff]
    %v119 = vld [vmem:[%s6 + $0xe8] sm:$0xff]
    %v120 = vld [vmem:[%s6 + $0xf0] sm:$0xff]
    %v121 = vld [vmem:[%s6 + $0xf8] sm:$0xff]
    %v154 = vunpack.c.l.b16 %v90
    %v155 = vunpack.c.h.b16 %v90
    %v156 = vunpack.c.l.b16 %v91
    %v157 = vunpack.c.h.b16 %v91
    %v158 = vunpack.c.l.b16 %v92
    %v159 = vunpack.c.h.b16 %v92
    %v160 = vunpack.c.l.b16 %v93
    %v161 = vunpack.c.h.b16 %v93
    %v162 = vunpack.c.l.b16 %v94
    %v163 = vunpack.c.h.b16 %v94
    %v164 = vunpack.c.l.b16 %v95
    %v165 = vunpack.c.h.b16 %v95
    %v166 = vunpack.c.l.b16 %v96
    %v167 = vunpack.c.h.b16 %v96
    %v168 = vunpack.c.l.b16 %v97
    %v169 = vunpack.c.h.b16 %v97
    %v170 = vunpack.c.l.b16 %v98
    %v171 = vunpack.c.h.b16 %v98
    %v172 = vunpack.c.l.b16 %v99
    %v173 = vunpack.c.h.b16 %v99
    %v174 = vunpack.c.l.b16 %v100
    %v175 = vunpack.c.h.b16 %v100
    %v176 = vunpack.c.l.b16 %v101
    %v177 = vunpack.c.h.b16 %v101
    %v178 = vunpack.c.l.b16 %v102
    %v179 = vunpack.c.h.b16 %v102
    %v180 = vunpack.c.l.b16 %v103
    %v181 = vunpack.c.h.b16 %v103
    %v182 = vunpack.c.l.b16 %v104
    %v183 = vunpack.c.h.b16 %v104
    %v184 = vunpack.c.l.b16 %v105
    %v185 = vunpack.c.h.b16 %v105
    %v186 = vunpack.c.l.b16 %v106
    %v187 = vunpack.c.h.b16 %v106
    %v188 = vunpack.c.l.b16 %v107
    %v189 = vunpack.c.h.b16 %v107
    %v190 = vunpack.c.l.b16 %v108
    %v191 = vunpack.c.h.b16 %v108
    %v192 = vunpack.c.l.b16 %v109
    %v193 = vunpack.c.h.b16 %v109
    %v194 = vunpack.c.l.b16 %v110
    %v195 = vunpack.c.h.b16 %v110
    %v196 = vunpack.c.l.b16 %v111
    %v197 = vunpack.c.h.b16 %v111
    %v198 = vunpack.c.l.b16 %v112
    %v199 = vunpack.c.h.b16 %v112
    %v200 = vunpack.c.l.b16 %v113
    %v201 = vunpack.c.h.b16 %v113
    %v202 = vunpack.c.l.b16 %v114
    %v203 = vunpack.c.h.b16 %v114
    %v204 = vunpack.c.l.b16 %v115
    %v205 = vunpack.c.h.b16 %v115
    %v206 = vunpack.c.l.b16 %v116
    %v207 = vunpack.c.h.b16 %v116
    %v208 = vunpack.c.l.b16 %v117
    %v209 = vunpack.c.h.b16 %v117
    %v210 = vunpack.c.l.b16 %v118
    %v211 = vunpack.c.h.b16 %v118
    %v212 = vunpack.c.l.b16 %v119
    %v213 = vunpack.c.h.b16 %v119
    %v214 = vunpack.c.l.b16 %v120
    %v215 = vunpack.c.h.b16 %v120
    %v216 = vunpack.c.l.b16 %v121
    %v217 = vunpack.c.h.b16 %v121
    %v218 = vpack.c.b16 %v158, %v154
    %v219 = vpack.c.b16 %v159, %v155
    %v220 = vpack.c.b16 %v160, %v156
    %v221 = vpack.c.b16 %v161, %v157
    %v222 = vpack.c.b16 %v166, %v162
    %v223 = vpack.c.b16 %v167, %v163
    %v224 = vpack.c.b16 %v168, %v164
    %v225 = vpack.c.b16 %v169, %v165
    %v226 = vpack.c.b16 %v174, %v170
    %v227 = vpack.c.b16 %v175, %v171
    %v228 = vpack.c.b16 %v176, %v172
    %v229 = vpack.c.b16 %v177, %v173
    %v230 = vpack.c.b16 %v182, %v178
    %v231 = vpack.c.b16 %v183, %v179
    %v232 = vpack.c.b16 %v184, %v180
    %v233 = vpack.c.b16 %v185, %v181
    %v234 = vpack.c.b16 %v190, %v186
    %v235 = vpack.c.b16 %v191, %v187
    %v236 = vpack.c.b16 %v192, %v188
    %v237 = vpack.c.b16 %v193, %v189
    %v238 = vpack.c.b16 %v198, %v194
    %v239 = vpack.c.b16 %v199, %v195
    %v240 = vpack.c.b16 %v200, %v196
    %v241 = vpack.c.b16 %v201, %v197
    %v242 = vpack.c.b16 %v206, %v202
    %v243 = vpack.c.b16 %v207, %v203
    %v244 = vpack.c.b16 %v208, %v204
    %v245 = vpack.c.b16 %v209, %v205
    %v246 = vpack.c.b16 %v214, %v210
    %v247 = vpack.c.b16 %v215, %v211
    %v248 = vpack.c.b16 %v216, %v212
    %v249 = vpack.c.b16 %v217, %v213
    %282 = vmatpush.bf16.msra.mxu0 %v246
    %283 = vmatpush.bf16.msra.mxu0 %v242
    %284 = vmatpush.bf16.msra.mxu0 %v238
    %285 = vmatpush.bf16.msra.mxu0 %v234
    %286 = vmatpush.bf16.msra.mxu0 %v230
    %287 = vmatpush.bf16.msra.mxu0 %v226
    %288 = vmatpush.bf16.msra.mxu0 %v222
    %289 = vmatpush.bf16.msra.mxu0 %v218
    %290 = vmatmul.bf16.gmra.mxu0 %v85
    %v291 = vpop.f32.mrf.mxu0
    %v292 = vadd.f32 0.0, %v291
    %v293 = vpop.f32.mrf.mxu0
    %294 = vdwg.mxu0
    %295 = vmatpush.bf16.msra.mxu0 %v247
    %296 = vmatpush.bf16.msra.mxu0 %v243
    %297 = vmatpush.bf16.msra.mxu0 %v239
    %298 = vmatpush.bf16.msra.mxu0 %v235
    %299 = vmatpush.bf16.msra.mxu0 %v231
    %300 = vmatpush.bf16.msra.mxu0 %v227
    %301 = vmatpush.bf16.msra.mxu0 %v223
    %302 = vmatpush.bf16.msra.mxu0 %v219
    %303 = vmatmul.bf16.gmra.mxu0 %v85
    %v304 = vpop.f32.mrf.mxu0
    %v305 = vadd.f32 0.0, %v304
    %v306 = vpop.f32.mrf.mxu0
    %307 = vdwg.mxu0
    %308 = vmatpush.bf16.msra.mxu0 %v248
    %309 = vmatpush.bf16.msra.mxu0 %v244
    %310 = vmatpush.bf16.msra.mxu0 %v240
    %311 = vmatpush.bf16.msra.mxu0 %v236
    %312 = vmatpush.bf16.msra.mxu0 %v232
    %313 = vmatpush.bf16.msra.mxu0 %v228
    %314 = vmatpush.bf16.msra.mxu0 %v224
    %315 = vmatpush.bf16.msra.mxu0 %v220
    %316 = vmatmul.bf16.gmra.mxu0 %v85
    %v317 = vpop.f32.mrf.mxu0
    %v318 = vadd.f32 0.0, %v317
    %v319 = vpop.f32.mrf.mxu0
    %320 = vdwg.mxu0
    %321 = vmatpush.bf16.msra.mxu0 %v249
    %322 = vmatpush.bf16.msra.mxu0 %v245
    %323 = vmatpush.bf16.msra.mxu0 %v241
    %324 = vmatpush.bf16.msra.mxu0 %v237
    %325 = vmatpush.bf16.msra.mxu0 %v233
    %326 = vmatpush.bf16.msra.mxu0 %v229
    %327 = vmatpush.bf16.msra.mxu0 %v225
    %328 = vmatpush.bf16.msra.mxu0 %v221
    %329 = vmatmul.bf16.gmra.mxu0 %v85
    %v330 = vpop.f32.mrf.mxu0
    %v331 = vadd.f32 0.0, %v330
    %v332 = vpop.f32.mrf.mxu0
    %333 = vdwg.mxu0
    %v334 = vld [vmem:[%s7] sm:$0xff]
    %v335 = vld [vmem:[%s7 + $0x8] sm:$0xf]
    %v336 = vld [vmem:[%s7 + $0xc] sm:$0xff]
    %v337 = vld [vmem:[%s7 + $0x14] sm:$0xf]
    %v338 = vld [vmem:[%s7 + $0x18] sm:$0xff]
    %v339 = vld [vmem:[%s7 + $0x20] sm:$0xf]
    %v340 = vld [vmem:[%s7 + $0x24] sm:$0xff]
    %v341 = vld [vmem:[%s7 + $0x2c] sm:$0xf]
    %v342 = vld [vmem:[%s7 + $0x30] sm:$0xff]
    %v343 = vld [vmem:[%s7 + $0x38] sm:$0xf]
    %v344 = vld [vmem:[%s7 + $0x3c] sm:$0xff]
    %v345 = vld [vmem:[%s7 + $0x44] sm:$0xf]
    %v346 = vld [vmem:[%s7 + $0x48] sm:$0xff]
    %v347 = vld [vmem:[%s7 + $0x50] sm:$0xf]
    %v348 = vld [vmem:[%s7 + $0x54] sm:$0xff]
    %v349 = vld [vmem:[%s7 + $0x5c] sm:$0xf]
    %v350 = vld [vmem:[%s7 + $0x60] sm:$0xff]
    %v351 = vld [vmem:[%s7 + $0x68] sm:$0xf]
    %v352 = vld [vmem:[%s7 + $0x6c] sm:$0xff]
    %v353 = vld [vmem:[%s7 + $0x74] sm:$0xf]
    %v354 = vld [vmem:[%s7 + $0x78] sm:$0xff]
    %v355 = vld [vmem:[%s7 + $0x80] sm:$0xf]
    %v356 = vld [vmem:[%s7 + $0x84] sm:$0xff]
    %v357 = vld [vmem:[%s7 + $0x8c] sm:$0xf]
    %v358 = vld [vmem:[%s7 + $0x90] sm:$0xff]
    %v359 = vld [vmem:[%s7 + $0x98] sm:$0xf]
    %v360 = vld [vmem:[%s7 + $0x9c] sm:$0xff]
    %v361 = vld [vmem:[%s7 + $0xa4] sm:$0xf]
    %v362 = vld [vmem:[%s7 + $0xa8] sm:$0xff]
    %v363 = vld [vmem:[%s7 + $0xb0] sm:$0xf]
    %v364 = vld [vmem:[%s7 + $0xb4] sm:$0xff]
    %v365 = vld [vmem:[%s7 + $0xbc] sm:$0xf]
    %v398 = vunpack.c.l.b16 %v334
    %v399 = vunpack.c.h.b16 %v334
    %v400 = vunpack.c.l.b16 %v335
    %v401 = vunpack.c.l.b16 %v336
    %v402 = vunpack.c.h.b16 %v336
    %v403 = vunpack.c.l.b16 %v337
    %v404 = vunpack.c.l.b16 %v338
    %v405 = vunpack.c.h.b16 %v338
    %v406 = vunpack.c.l.b16 %v339
    %v407 = vunpack.c.l.b16 %v340
    %v408 = vunpack.c.h.b16 %v340
    %v409 = vunpack.c.l.b16 %v341
    %v410 = vunpack.c.l.b16 %v342
    %v411 = vunpack.c.h.b16 %v342
    %v412 = vunpack.c.l.b16 %v343
    %v413 = vunpack.c.l.b16 %v344
    %v414 = vunpack.c.h.b16 %v344
    %v415 = vunpack.c.l.b16 %v345
    %v416 = vunpack.c.l.b16 %v346
    %v417 = vunpack.c.h.b16 %v346
    %v418 = vunpack.c.l.b16 %v347
    %v419 = vunpack.c.l.b16 %v348
    %v420 = vunpack.c.h.b16 %v348
    %v421 = vunpack.c.l.b16 %v349
    %v422 = vunpack.c.l.b16 %v350
    %v423 = vunpack.c.h.b16 %v350
    %v424 = vunpack.c.l.b16 %v351
    %v425 = vunpack.c.l.b16 %v352
    %v426 = vunpack.c.h.b16 %v352
    %v427 = vunpack.c.l.b16 %v353
    %v428 = vunpack.c.l.b16 %v354
    %v429 = vunpack.c.h.b16 %v354
    %v430 = vunpack.c.l.b16 %v355
    %v431 = vunpack.c.l.b16 %v356
    %v432 = vunpack.c.h.b16 %v356
    %v433 = vunpack.c.l.b16 %v357
    %v434 = vunpack.c.l.b16 %v358
    %v435 = vunpack.c.h.b16 %v358
    %v436 = vunpack.c.l.b16 %v359
    %v437 = vunpack.c.l.b16 %v360
    %v438 = vunpack.c.h.b16 %v360
    %v439 = vunpack.c.l.b16 %v361
    %v440 = vunpack.c.l.b16 %v362
    %v441 = vunpack.c.h.b16 %v362
    %v442 = vunpack.c.l.b16 %v363
    %v443 = vunpack.c.l.b16 %v364
    %v444 = vunpack.c.h.b16 %v364
    %v445 = vunpack.c.l.b16 %v365
    %v446 = vpack.c.b16 %v401, %v398
    %v447 = vpack.c.b16 %v402, %v399
    %v448 = vpack.c.b16 %v403, %v400
    %v449 = vpack.c.b16 %v407, %v404
    %v450 = vpack.c.b16 %v408, %v405
    %v451 = vpack.c.b16 %v409, %v406
    %v452 = vpack.c.b16 %v413, %v410
    %v453 = vpack.c.b16 %v414, %v411
    %v454 = vpack.c.b16 %v415, %v412
    %v455 = vpack.c.b16 %v419, %v416
    %v456 = vpack.c.b16 %v420, %v417
    %v457 = vpack.c.b16 %v421, %v418
    %v458 = vpack.c.b16 %v425, %v422
    %v459 = vpack.c.b16 %v426, %v423
    %v460 = vpack.c.b16 %v427, %v424
    %v461 = vpack.c.b16 %v431, %v428
    %v462 = vpack.c.b16 %v432, %v429
    %v463 = vpack.c.b16 %v433, %v430
    %v464 = vpack.c.b16 %v437, %v434
    %v465 = vpack.c.b16 %v438, %v435
    %v466 = vpack.c.b16 %v439, %v436
    %v467 = vpack.c.b16 %v443, %v440
    %v468 = vpack.c.b16 %v444, %v441
    %v469 = vpack.c.b16 %v445, %v442
    %494 = vmatpush.bf16.msra.mxu0 %v467
    %495 = vmatpush.bf16.msra.mxu0 %v464
    %496 = vmatpush.bf16.msra.mxu0 %v461
    %497 = vmatpush.bf16.msra.mxu0 %v458
    %498 = vmatpush.bf16.msra.mxu0 %v455
    %499 = vmatpush.bf16.msra.mxu0 %v452
    %500 = vmatpush.bf16.msra.mxu0 %v449
    %501 = vmatpush.bf16.msra.mxu0 %v446
    %502 = vmatmul.bf16.gmra.mxu0 %v87
    %v503 = vpop.f32.mrf.mxu0
    %v504 = vadd.f32 0.0, %v503
    %v505 = vpop.f32.mrf.mxu0
    %506 = vdwg.mxu0
    %507 = vmatpush.bf16.msra.mxu0 %v468
    %508 = vmatpush.bf16.msra.mxu0 %v465
    %509 = vmatpush.bf16.msra.mxu0 %v462
    %510 = vmatpush.bf16.msra.mxu0 %v459
    %511 = vmatpush.bf16.msra.mxu0 %v456
    %512 = vmatpush.bf16.msra.mxu0 %v453
    %513 = vmatpush.bf16.msra.mxu0 %v450
    %514 = vmatpush.bf16.msra.mxu0 %v447
    %515 = vmatmul.bf16.gmra.mxu0 %v87
    %v516 = vpop.f32.mrf.mxu0
    %v517 = vadd.f32 0.0, %v516
    %v518 = vpop.f32.mrf.mxu0
    %519 = vdwg.mxu0
    %520 = vmatpush.bf16.msra.mxu0 %v469
    %521 = vmatpush.bf16.msra.mxu0 %v466
    %522 = vmatpush.bf16.msra.mxu0 %v463
    %523 = vmatpush.bf16.msra.mxu0 %v460
    %524 = vmatpush.bf16.msra.mxu0 %v457
    %525 = vmatpush.bf16.msra.mxu0 %v454
    %526 = vmatpush.bf16.msra.mxu0 %v451
    %527 = vmatpush.bf16.msra.mxu0 %v448
    %528 = vmatmul.bf16.gmra.mxu0 %v87
    %v529 = vpop.f32.mrf.mxu0
    %v530 = vadd.f32 0.0, %v529
    %v531 = vpop.f32.mrf.mxu0
    %532 = vdwg.mxu0
    %v533 = vld [vmem:[%s8] sm:$0xff]
    %v534 = vld [vmem:[%s8 + $0x8] sm:$0xff]
    %v535 = vld [vmem:[%s8 + $0x10] sm:$0xff]
    %v536 = vld [vmem:[%s8 + $0x18] sm:$0xff]
    %v537 = vld [vmem:[%s8 + $0x20] sm:$0xff]
    %v538 = vld [vmem:[%s8 + $0x28] sm:$0xff]
    %v539 = vld [vmem:[%s8 + $0x30] sm:$0xff]
    %v540 = vld [vmem:[%s8 + $0x38] sm:$0xff]
    %v541 = vld [vmem:[%s8 + $0x40] sm:$0xff]
    %v542 = vld [vmem:[%s8 + $0x48] sm:$0xff]
    %v543 = vld [vmem:[%s8 + $0x50] sm:$0xff]
    %v544 = vld [vmem:[%s8 + $0x58] sm:$0xff]
    %v545 = vld [vmem:[%s8 + $0x60] sm:$0xff]
    %v546 = vld [vmem:[%s8 + $0x68] sm:$0xff]
    %v547 = vld [vmem:[%s8 + $0x70] sm:$0xff]
    %v548 = vld [vmem:[%s8 + $0x78] sm:$0xff]
    %v565 = vunpack.c.l.b16 %v533
    %v566 = vunpack.c.h.b16 %v533
    %v567 = vunpack.c.l.b16 %v534
    %v568 = vunpack.c.h.b16 %v534
    %v569 = vunpack.c.l.b16 %v535
    %v570 = vunpack.c.h.b16 %v535
    %v571 = vunpack.c.l.b16 %v536
    %v572 = vunpack.c.h.b16 %v536
    %v573 = vunpack.c.l.b16 %v537
    %v574 = vunpack.c.h.b16 %v537
    %v575 = vunpack.c.l.b16 %v538
    %v576 = vunpack.c.h.b16 %v538
    %v577 = vunpack.c.l.b16 %v539
    %v578 = vunpack.c.h.b16 %v539
    %v579 = vunpack.c.l.b16 %v540
    %v580 = vunpack.c.h.b16 %v540
    %v581 = vunpack.c.l.b16 %v541
    %v582 = vunpack.c.h.b16 %v541
    %v583 = vunpack.c.l.b16 %v542
    %v584 = vunpack.c.h.b16 %v542
    %v585 = vunpack.c.l.b16 %v543
    %v586 = vunpack.c.h.b16 %v543
    %v587 = vunpack.c.l.b16 %v544
    %v588 = vunpack.c.h.b16 %v544
    %v589 = vunpack.c.l.b16 %v545
    %v590 = vunpack.c.h.b16 %v545
    %v591 = vunpack.c.l.b16 %v546
    %v592 = vunpack.c.h.b16 %v546
    %v593 = vunpack.c.l.b16 %v547
    %v594 = vunpack.c.h.b16 %v547
    %v595 = vunpack.c.l.b16 %v548
    %v596 = vunpack.c.h.b16 %v548
    %v597 = vpack.c.b16 %v567, %v565
    %v598 = vpack.c.b16 %v568, %v566
    %v599 = vpack.c.b16 %v571, %v569
    %v600 = vpack.c.b16 %v572, %v570
    %v601 = vpack.c.b16 %v575, %v573
    %v602 = vpack.c.b16 %v576, %v574
    %v603 = vpack.c.b16 %v579, %v577
    %v604 = vpack.c.b16 %v580, %v578
    %v605 = vpack.c.b16 %v583, %v581
    %v606 = vpack.c.b16 %v584, %v582
    %v607 = vpack.c.b16 %v587, %v585
    %v608 = vpack.c.b16 %v588, %v586
    %v609 = vpack.c.b16 %v591, %v589
    %v610 = vpack.c.b16 %v592, %v590
    %v611 = vpack.c.b16 %v595, %v593
    %v612 = vpack.c.b16 %v596, %v594
    %629 = vmatpush.bf16.msra.mxu0 %v611
    %630 = vmatpush.bf16.msra.mxu0 %v609
    %631 = vmatpush.bf16.msra.mxu0 %v607
    %632 = vmatpush.bf16.msra.mxu0 %v605
    %633 = vmatpush.bf16.msra.mxu0 %v603
    %634 = vmatpush.bf16.msra.mxu0 %v601
    %635 = vmatpush.bf16.msra.mxu0 %v599
    %636 = vmatpush.bf16.msra.mxu0 %v597
    %637 = vmatmul.bf16.gmra.mxu0 %v89
    %v638 = vpop.f32.mrf.mxu0
    %v639 = vadd.f32 0.0, %v638
    %v640 = vpop.f32.mrf.mxu0
    %641 = vdwg.mxu0
    %642 = vmatpush.bf16.msra.mxu0 %v612
    %643 = vmatpush.bf16.msra.mxu0 %v610
    %644 = vmatpush.bf16.msra.mxu0 %v608
    %645 = vmatpush.bf16.msra.mxu0 %v606
    %646 = vmatpush.bf16.msra.mxu0 %v604
    %647 = vmatpush.bf16.msra.mxu0 %v602
    %648 = vmatpush.bf16.msra.mxu0 %v600
    %649 = vmatpush.bf16.msra.mxu0 %v598
    %650 = vmatmul.bf16.gmra.mxu0 %v89
    %v651 = vpop.f32.mrf.mxu0
    %v652 = vadd.f32 0.0, %v651
    %v653 = vpop.f32.mrf.mxu0
    %654 = vdwg.mxu0
    %v655 = vadd.f32 %v292, %v504
    %v656 = vadd.f32 %v305, %v517
    %v657 = vadd.f32 %v655, %v639
    %v658 = vadd.f32 %v656, %v652
    %v659 = vld [vmem:[%s9] sm:$0x3]
    %v661 = vperm.slane %v659, 0
    %v662 = vperm.slane %v659, 1
    %v665 = vadd.f32 %v657, %v661
    %v666 = vadd.f32 %v658, %v662
    %v667 = vmax.f32 %v665, 0.0
    %v668 = vmax.f32 %v666, 0.0
    %v669 = vpack.c.bf16 %v667, %v667
    %v670 = vpack.c.bf16 %v668, %v668
    %v671 = vld [vmem:[%s12] sm:$0xf]
    %v672 = vld [vmem:[%s12 + $0x4] sm:$0xf]
    %v673 = vld [vmem:[%s12 + $0x8] sm:$0xf]
    %v674 = vld [vmem:[%s12 + $0xc] sm:$0xf]
    %v675 = vld [vmem:[%s12 + $0x10] sm:$0xf]
    %v676 = vld [vmem:[%s12 + $0x14] sm:$0xf]
    %v677 = vld [vmem:[%s12 + $0x18] sm:$0xf]
    %v678 = vld [vmem:[%s12 + $0x1c] sm:$0xf]
    %v679 = vld [vmem:[%s12 + $0x20] sm:$0xf]
    %v680 = vld [vmem:[%s12 + $0x24] sm:$0xf]
    %v681 = vld [vmem:[%s12 + $0x28] sm:$0xf]
    %v682 = vld [vmem:[%s12 + $0x2c] sm:$0xf]
    %v683 = vld [vmem:[%s12 + $0x30] sm:$0xf]
    %v684 = vld [vmem:[%s12 + $0x34] sm:$0xf]
    %v685 = vld [vmem:[%s12 + $0x38] sm:$0xf]
    %v686 = vld [vmem:[%s12 + $0x3c] sm:$0xf]
    %v687 = vld [vmem:[%s12 + $0x40] sm:$0xf]
    %v688 = vld [vmem:[%s12 + $0x44] sm:$0xf]
    %v689 = vld [vmem:[%s12 + $0x48] sm:$0xf]
    %v690 = vld [vmem:[%s12 + $0x4c] sm:$0xf]
    %v691 = vld [vmem:[%s12 + $0x50] sm:$0xf]
    %v692 = vld [vmem:[%s12 + $0x54] sm:$0xf]
    %v693 = vld [vmem:[%s12 + $0x58] sm:$0xf]
    %v694 = vld [vmem:[%s12 + $0x5c] sm:$0xf]
    %v695 = vld [vmem:[%s12 + $0x60] sm:$0xf]
    %v696 = vld [vmem:[%s12 + $0x64] sm:$0xf]
    %v697 = vld [vmem:[%s12 + $0x68] sm:$0xf]
    %v698 = vld [vmem:[%s12 + $0x6c] sm:$0xf]
    %v699 = vld [vmem:[%s12 + $0x70] sm:$0xf]
    %v700 = vld [vmem:[%s12 + $0x74] sm:$0xf]
    %v701 = vld [vmem:[%s12 + $0x78] sm:$0xf]
    %v702 = vld [vmem:[%s12 + $0x7c] sm:$0xf]
    %v703 = vld [vmem:[%s13] sm:$0x1]
    %v705 = vperm.slane %v703, 0
    %v739 = vunpack.c.l.b16 %v671
    %v740 = vunpack.c.l.b16 %v672
    %v741 = vunpack.c.l.b16 %v673
    %v742 = vunpack.c.l.b16 %v674
    %v743 = vunpack.c.l.b16 %v675
    %v744 = vunpack.c.l.b16 %v676
    %v745 = vunpack.c.l.b16 %v677
    %v746 = vunpack.c.l.b16 %v678
    %v747 = vunpack.c.l.b16 %v679
    %v748 = vunpack.c.l.b16 %v680
    %v749 = vunpack.c.l.b16 %v681
    %v750 = vunpack.c.l.b16 %v682
    %v751 = vunpack.c.l.b16 %v683
    %v752 = vunpack.c.l.b16 %v684
    %v753 = vunpack.c.l.b16 %v685
    %v754 = vunpack.c.l.b16 %v686
    %v755 = vunpack.c.l.b16 %v687
    %v756 = vunpack.c.l.b16 %v688
    %v757 = vunpack.c.l.b16 %v689
    %v758 = vunpack.c.l.b16 %v690
    %v759 = vunpack.c.l.b16 %v691
    %v760 = vunpack.c.l.b16 %v692
    %v761 = vunpack.c.l.b16 %v693
    %v762 = vunpack.c.l.b16 %v694
    %v763 = vunpack.c.l.b16 %v695
    %v764 = vunpack.c.l.b16 %v696
    %v765 = vunpack.c.l.b16 %v697
    %v766 = vunpack.c.l.b16 %v698
    %v767 = vunpack.c.l.b16 %v699
    %v768 = vunpack.c.l.b16 %v700
    %v769 = vunpack.c.l.b16 %v701
    %v770 = vunpack.c.l.b16 %v702
    %v771 = vpack.c.b16 %v740, %v739
    %v772 = vpack.c.b16 %v742, %v741
    %v773 = vpack.c.b16 %v744, %v743
    %v774 = vpack.c.b16 %v746, %v745
    %v775 = vpack.c.b16 %v748, %v747
    %v776 = vpack.c.b16 %v750, %v749
    %v777 = vpack.c.b16 %v752, %v751
    %v778 = vpack.c.b16 %v754, %v753
    %v779 = vpack.c.b16 %v756, %v755
    %v780 = vpack.c.b16 %v758, %v757
    %v781 = vpack.c.b16 %v760, %v759
    %v782 = vpack.c.b16 %v762, %v761
    %v783 = vpack.c.b16 %v764, %v763
    %v784 = vpack.c.b16 %v766, %v765
    %v785 = vpack.c.b16 %v768, %v767
    %v786 = vpack.c.b16 %v770, %v769
    %803 = vmatpush.bf16.msra.mxu0 %v778
    %804 = vmatpush.bf16.msra.mxu0 %v777
    %805 = vmatpush.bf16.msra.mxu0 %v776
    %806 = vmatpush.bf16.msra.mxu0 %v775
    %807 = vmatpush.bf16.msra.mxu0 %v774
    %808 = vmatpush.bf16.msra.mxu0 %v773
    %809 = vmatpush.bf16.msra.mxu0 %v772
    %810 = vmatpush.bf16.msra.mxu0 %v771
    %811 = vmatmul.bf16.gmra.mxu0 %v669
    %v812 = vpop.f32.mrf.mxu0
    %v813 = vadd.f32 %v705, %v812
    %v814 = vpop.f32.mrf.mxu0
    %815 = vdwg.mxu0
    %816 = vmatpush.bf16.msra.mxu0 %v786
    %817 = vmatpush.bf16.msra.mxu0 %v785
    %818 = vmatpush.bf16.msra.mxu0 %v784
    %819 = vmatpush.bf16.msra.mxu0 %v783
    %820 = vmatpush.bf16.msra.mxu0 %v782
    %821 = vmatpush.bf16.msra.mxu0 %v781
    %822 = vmatpush.bf16.msra.mxu0 %v780
    %823 = vmatpush.bf16.msra.mxu0 %v779
    %824 = vmatmul.bf16.gmra.mxu0 %v670
    %v825 = vpop.f32.mrf.mxu0
    %v826 = vadd.f32 %v813, %v825
    %v827 = vpop.f32.mrf.mxu0
    %828 = vdwg.mxu0
    %v829 = vmax.f32 %v826, 0.0
    %v830 = vld [vmem:[%s10] sm:$0x1]
    %v832 = vperm.slane %v830, 0
    %v834 = vadd.f32 %v318, %v832
    %v835 = vmax.f32 %v834, 0.0
    %v836 = vadd.f32 %v331, %v530
    %v837 = vld [vmem:[%s11] sm:$0x1]
    %v839 = vperm.slane %v837, 0
    %v841 = vadd.f32 %v836, %v839
    %v842 = vmax.f32 %v841, 0.0
    %v843 = vld [vmem:[%s14] sm:$0x1]
    %v844 = vpack.c.bf16 %v835, %v835
    %s845 = sld [smem:[#allocation2]]
    %v846 = vstv %s845
    %847 = vmatpush.bf16.xpose.msra.mxu0 0
    %848 = vmatpush.bf16.xpose.msra.mxu0 0
    %849 = vmatpush.bf16.xpose.msra.mxu0 0
    %850 = vmatpush.bf16.xpose.msra.mxu0 0
    %851 = vmatpush.bf16.xpose.msra.mxu0 0
    %852 = vmatpush.bf16.xpose.msra.mxu0 0
    %853 = vmatpush.bf16.xpose.msra.mxu0 0
    %854 = vmatpush.bf16.xpose.msra.mxu0 %v844
    %855 = vmatmul.bf16.gmra.mxu0 %v843
    %v856 = vpop.f32.mrf.mxu0
    %v857 = vadd.f32 %v846, %v856
    %v858 = vpop.f32.mrf.mxu0
    %859 = vdwg.mxu0
    %v860 = vld [vmem:[%s15] sm:$0x1]
    %v861 = vpack.c.bf16 %v842, %v842
    %s862 = sld [smem:[#allocation2 + $0x1]]
    %v863 = vstv %s862
    %864 = vmatpush.bf16.xpose.msra.mxu0 0
    %865 = vmatpush.bf16.xpose.msra.mxu0 0
    %866 = vmatpush.bf16.xpose.msra.mxu0 0
    %867 = vmatpush.bf16.xpose.msra.mxu0 0
    %868 = vmatpush.bf16.xpose.msra.mxu0 0
    %869 = vmatpush.bf16.xpose.msra.mxu0 0
    %870 = vmatpush.bf16.xpose.msra.mxu0 0
    %871 = vmatpush.bf16.xpose.msra.mxu0 %v861
    %872 = vmatmul.bf16.gmra.mxu0 %v860
    %v873 = vpop.f32.mrf.mxu0
    %v874 = vadd.f32 %v863, %v873
    %v875 = vpop.f32.mrf.mxu0
    %876 = vdwg.mxu0
    %vm877 = vcmask 57344
    %878 = vst.msk [vmem:[%s21] sm:$0x1] %vm877, %v857
    %879 = vst.msk [vmem:[%s21 + $0x1] sm:$0x1] %vm877, %v874
    %v880 = vld [vmem:[%s4] sm:$0xff]
    %v881 = vld [vmem:[%s5] sm:$0xff]
    %883 = vset.pattern.permute.xlu0 0
    %884 = vperm.xlu0 %883, %v880
    %v885 = vpop.permute.xlu0 %884
    %v887 = vmul.f32 %v881, %v885
    %s888 = scalar_lea.vmem %s5, 8
    %v889 = vld [vmem:[%s888] sm:$0xff]
    %v890 = vmul.f32 %v889, %v885
    %v891 = vld [vmem:[%s3] sm:$0xff]
    %v892 = vcvt.s32.f32 %v891
    %v893 = vadd.f32 %v892, 1.0
    %v894 = vmul.f32 %v893, %v880
    %v895 = vcvt.f32.s32.to.zero.pseudo %v894
    %v896 = vlaneseq
    %v897 = vand.u32 %v896, 127
    %898 = vset.pattern.permute.xlu0 0
    %899 = vperm.xlu0 %898, %v895
    %v900 = vpop.permute.xlu0 %899
    %vm901 = vcmp.eq.s32.totalorder %v897, %v900
    %v902 = vsel %vm901, 1, 0
    %v903 = vcvt.s32.f32 %v902
    %v904 = vld [vmem:[%s17] sm:$0xff]
    %v905 = vld [vmem:[%s17 + $0x8] sm:$0xff]
    %v906 = vld [vmem:[%s17 + $0x10] sm:$0xff]
    %v907 = vld [vmem:[%s17 + $0x18] sm:$0xff]
    %v908 = vpack.c.bf16 %v829, %v829
    %v909 = vld [vmem:[%s18] sm:$0xff]
    %v910 = vld [vmem:[%s18 + $0x8] sm:$0xff]
    %v911 = vld [vmem:[%s18 + $0x10] sm:$0xff]
    %v912 = vld [vmem:[%s18 + $0x18] sm:$0xff]
    %v913 = vld [vmem:[%s18 + $0x20] sm:$0xff]
    %v914 = vld [vmem:[%s18 + $0x28] sm:$0xff]
    %v915 = vld [vmem:[%s18 + $0x30] sm:$0xff]
    %v916 = vld [vmem:[%s18 + $0x38] sm:$0xff]
    %v917 = vld [vmem:[%s18 + $0x40] sm:$0xff]
    %v918 = vld [vmem:[%s18 + $0x48] sm:$0xff]
    %v919 = vld [vmem:[%s18 + $0x50] sm:$0xff]
    %v920 = vld [vmem:[%s18 + $0x58] sm:$0xff]
    %v921 = vld [vmem:[%s18 + $0x60] sm:$0xff]
    %v922 = vld [vmem:[%s18 + $0x68] sm:$0xff]
    %v923 = vld [vmem:[%s18 + $0x70] sm:$0xff]
    %v924 = vld [vmem:[%s18 + $0x78] sm:$0xff]
    %v925 = vld [vmem:[%s18 + $0x80] sm:$0xff]
    %v926 = vld [vmem:[%s18 + $0x88] sm:$0xff]
    %v927 = vld [vmem:[%s18 + $0x90] sm:$0xff]
    %v928 = vld [vmem:[%s18 + $0x98] sm:$0xff]
    %v929 = vld [vmem:[%s18 + $0xa0] sm:$0xff]
    %v930 = vld [vmem:[%s18 + $0xa8] sm:$0xff]
    %v931 = vld [vmem:[%s18 + $0xb0] sm:$0xff]
    %v932 = vld [vmem:[%s18 + $0xb8] sm:$0xff]
    %v933 = vld [vmem:[%s18 + $0xc0] sm:$0xff]
    %v934 = vld [vmem:[%s18 + $0xc8] sm:$0xff]
    %v935 = vld [vmem:[%s18 + $0xd0] sm:$0xff]
    %v936 = vld [vmem:[%s18 + $0xd8] sm:$0xff]
    %v937 = vld [vmem:[%s18 + $0xe0] sm:$0xff]
    %v938 = vld [vmem:[%s18 + $0xe8] sm:$0xff]
    %v939 = vld [vmem:[%s18 + $0xf0] sm:$0xff]
    %v940 = vld [vmem:[%s18 + $0xf8] sm:$0xff]
    %v973 = vunpack.c.l.b16 %v909
    %v974 = vunpack.c.h.b16 %v909
    %v975 = vunpack.c.l.b16 %v910
    %v976 = vunpack.c.h.b16 %v910
    %v977 = vunpack.c.l.b16 %v911
    %v978 = vunpack.c.h.b16 %v911
    %v979 = vunpack.c.l.b16 %v912
    %v980 = vunpack.c.h.b16 %v912
    %v981 = vunpack.c.l.b16 %v913
    %v982 = vunpack.c.h.b16 %v913
    %v983 = vunpack.c.l.b16 %v914
    %v984 = vunpack.c.h.b16 %v914
    %v985 = vunpack.c.l.b16 %v915
    %v986 = vunpack.c.h.b16 %v915
    %v987 = vunpack.c.l.b16 %v916
    %v988 = vunpack.c.h.b16 %v916
    %v989 = vunpack.c.l.b16 %v917
    %v990 = vunpack.c.h.b16 %v917
    %v991 = vunpack.c.l.b16 %v918
    %v992 = vunpack.c.h.b16 %v918
    %v993 = vunpack.c.l.b16 %v919
    %v994 = vunpack.c.h.b16 %v919
    %v995 = vunpack.c.l.b16 %v920
    %v996 = vunpack.c.h.b16 %v920
    %v997 = vunpack.c.l.b16 %v921
    %v998 = vunpack.c.h.b16 %v921
    %v999 = vunpack.c.l.b16 %v922
    %v1000 = vunpack.c.h.b16 %v922
    %v1001 = vunpack.c.l.b16 %v923
    %v1002 = vunpack.c.h.b16 %v923
    %v1003 = vunpack.c.l.b16 %v924
    %v1004 = vunpack.c.h.b16 %v924
    %v1005 = vunpack.c.l.b16 %v925
    %v1006 = vunpack.c.h.b16 %v925
    %v1007 = vunpack.c.l.b16 %v926
    %v1008 = vunpack.c.h.b16 %v926
    %v1009 = vunpack.c.l.b16 %v927
    %v1010 = vunpack.c.h.b16 %v927
    %v1011 = vunpack.c.l.b16 %v928
    %v1012 = vunpack.c.h.b16 %v928
    %v1013 = vunpack.c.l.b16 %v929
    %v1014 = vunpack.c.h.b16 %v929
    %v1015 = vunpack.c.l.b16 %v930
    %v1016 = vunpack.c.h.b16 %v930
    %v1017 = vunpack.c.l.b16 %v931
    %v1018 = vunpack.c.h.b16 %v931
    %v1019 = vunpack.c.l.b16 %v932
    %v1020 = vunpack.c.h.b16 %v932
    %v1021 = vunpack.c.l.b16 %v933
    %v1022 = vunpack.c.h.b16 %v933
    %v1023 = vunpack.c.l.b16 %v934
    %v1024 = vunpack.c.h.b16 %v934
    %v1025 = vunpack.c.l.b16 %v935
    %v1026 = vunpack.c.h.b16 %v935
    %v1027 = vunpack.c.l.b16 %v936
    %v1028 = vunpack.c.h.b16 %v936
    %v1029 = vunpack.c.l.b16 %v937
    %v1030 = vunpack.c.h.b16 %v937
    %v1031 = vunpack.c.l.b16 %v938
    %v1032 = vunpack.c.h.b16 %v938
    %v1033 = vunpack.c.l.b16 %v939
    %v1034 = vunpack.c.h.b16 %v939
    %v1035 = vunpack.c.l.b16 %v940
    %v1036 = vunpack.c.h.b16 %v940
    %v1037 = vpack.c.b16 %v977, %v973
    %v1038 = vpack.c.b16 %v978, %v974
    %v1039 = vpack.c.b16 %v979, %v975
    %v1040 = vpack.c.b16 %v980, %v976
    %v1041 = vpack.c.b16 %v985, %v981
    %v1042 = vpack.c.b16 %v986, %v982
    %v1043 = vpack.c.b16 %v987, %v983
    %v1044 = vpack.c.b16 %v988, %v984
    %v1045 = vpack.c.b16 %v993, %v989
    %v1046 = vpack.c.b16 %v994, %v990
    %v1047 = vpack.c.b16 %v995, %v991
    %v1048 = vpack.c.b16 %v996, %v992
    %v1049 = vpack.c.b16 %v1001, %v997
    %v1050 = vpack.c.b16 %v1002, %v998
    %v1051 = vpack.c.b16 %v1003, %v999
    %v1052 = vpack.c.b16 %v1004, %v1000
    %v1053 = vpack.c.b16 %v1009, %v1005
    %v1054 = vpack.c.b16 %v1010, %v1006
    %v1055 = vpack.c.b16 %v1011, %v1007
    %v1056 = vpack.c.b16 %v1012, %v1008
    %v1057 = vpack.c.b16 %v1017, %v1013
    %v1058 = vpack.c.b16 %v1018, %v1014
    %v1059 = vpack.c.b16 %v1019, %v1015
    %v1060 = vpack.c.b16 %v1020, %v1016
    %v1061 = vpack.c.b16 %v1025, %v1021
    %v1062 = vpack.c.b16 %v1026, %v1022
    %v1063 = vpack.c.b16 %v1027, %v1023
    %v1064 = vpack.c.b16 %v1028, %v1024
    %v1065 = vpack.c.b16 %v1033, %v1029
    %v1066 = vpack.c.b16 %v1034, %v1030
    %v1067 = vpack.c.b16 %v1035, %v1031
    %v1068 = vpack.c.b16 %v1036, %v1032
    %1101 = vmatpush.bf16.msra.mxu0 %v1065
    %1102 = vmatpush.bf16.msra.mxu0 %v1061
    %1103 = vmatpush.bf16.msra.mxu0 %v1057
    %1104 = vmatpush.bf16.msra.mxu0 %v1053
    %1105 = vmatpush.bf16.msra.mxu0 %v1049
    %1106 = vmatpush.bf16.msra.mxu0 %v1045
    %1107 = vmatpush.bf16.msra.mxu0 %v1041
    %1108 = vmatpush.bf16.msra.mxu0 %v1037
    %1109 = vmatmul.bf16.gmra.mxu0 %v908
    %v1110 = vpop.f32.mrf.mxu0
    %v1111 = vadd.f32 0.0, %v1110
    %v1112 = vpop.f32.mrf.mxu0
    %1113 = vdwg.mxu0
    %1114 = vmatpush.bf16.msra.mxu0 %v1066
    %1115 = vmatpush.bf16.msra.mxu0 %v1062
    %1116 = vmatpush.bf16.msra.mxu0 %v1058
    %1117 = vmatpush.bf16.msra.mxu0 %v1054
    %1118 = vmatpush.bf16.msra.mxu0 %v1050
    %1119 = vmatpush.bf16.msra.mxu0 %v1046
    %1120 = vmatpush.bf16.msra.mxu0 %v1042
    %1121 = vmatpush.bf16.msra.mxu0 %v1038
    %1122 = vmatmul.bf16.gmra.mxu0 %v908
    %v1123 = vpop.f32.mrf.mxu0
    %v1124 = vadd.f32 0.0, %v1123
    %v1125 = vpop.f32.mrf.mxu0
    %1126 = vdwg.mxu0
    %1127 = vmatpush.bf16.msra.mxu0 %v1067
    %1128 = vmatpush.bf16.msra.mxu0 %v1063
    %1129 = vmatpush.bf16.msra.mxu0 %v1059
    %1130 = vmatpush.bf16.msra.mxu0 %v1055
    %1131 = vmatpush.bf16.msra.mxu0 %v1051
    %1132 = vmatpush.bf16.msra.mxu0 %v1047
    %1133 = vmatpush.bf16.msra.mxu0 %v1043
    %1134 = vmatpush.bf16.msra.mxu0 %v1039
    %1135 = vmatmul.bf16.gmra.mxu0 %v908
    %v1136 = vpop.f32.mrf.mxu0
    %v1137 = vadd.f32 0.0, %v1136
    %v1138 = vpop.f32.mrf.mxu0
    %1139 = vdwg.mxu0
    %1140 = vmatpush.bf16.msra.mxu0 %v1068
    %1141 = vmatpush.bf16.msra.mxu0 %v1064
    %1142 = vmatpush.bf16.msra.mxu0 %v1060
    %1143 = vmatpush.bf16.msra.mxu0 %v1056
    %1144 = vmatpush.bf16.msra.mxu0 %v1052
    %1145 = vmatpush.bf16.msra.mxu0 %v1048
    %1146 = vmatpush.bf16.msra.mxu0 %v1044
    %1147 = vmatpush.bf16.msra.mxu0 %v1040
    %1148 = vmatmul.bf16.gmra.mxu0 %v908
    %v1149 = vpop.f32.mrf.mxu0
    %v1150 = vadd.f32 0.0, %v1149
    %v1151 = vpop.f32.mrf.mxu0
    %1152 = vdwg.mxu0
    %vm1153 = vcmask 64512
    %v1155 = vsel %vm1153, %v903, 0
    %1157 = vmatpush.msra.mxu0 0.0
    %1158 = vmatpush.msra.mxu0 0.0
    %1159 = vmatpush.msra.mxu0 0.0
    %1160 = vmatpush.msra.mxu0 0.0
    %1161 = vmatpush.msra.mxu0 0.0
    %1162 = vmatpush.msra.mxu0 0.0
    %1163 = vmatpush.msra.mxu0 0.0
    %1164 = vmatpush.msra.mxu0 0.0
    %1165 = vmatpush.msra.mxu0 0.0
    %1166 = vmatpush.msra.mxu0 0.0
    %1167 = vmatpush.msra.mxu0 0.0
    %1168 = vmatpush.msra.mxu0 0.0
    %1169 = vmatpush.msra.mxu0 0.0
    %1170 = vmatpush.msra.mxu0 0.0
    %1171 = vmatpush.msra.mxu0 0.0
    %1172 = vmatpush.msra.mxu0 %v904
    %1173 = vmatmul.f32.gmra.mxu0 %v1155
    %v1174 = vpop.f32.mrf.mxu0
    %v1175 = vadd.f32 %v1111, %v1174
    %1176 = vdwg.mxu0
    %1177 = vmatpush.msra.mxu0 0.0
    %1178 = vmatpush.msra.mxu0 0.0
    %1179 = vmatpush.msra.mxu0 0.0
    %1180 = vmatpush.msra.mxu0 0.0
    %1181 = vmatpush.msra.mxu0 0.0
    %1182 = vmatpush.msra.mxu0 0.0
    %1183 = vmatpush.msra.mxu0 0.0
    %1184 = vmatpush.msra.mxu0 0.0
    %1185 = vmatpush.msra.mxu0 0.0
    %1186 = vmatpush.msra.mxu0 0.0
    %1187 = vmatpush.msra.mxu0 0.0
    %1188 = vmatpush.msra.mxu0 0.0
    %1189 = vmatpush.msra.mxu0 0.0
    %1190 = vmatpush.msra.mxu0 0.0
    %1191 = vmatpush.msra.mxu0 0.0
    %1192 = vmatpush.msra.mxu0 %v905
    %1193 = vmatmul.f32.gmra.mxu0 %v1155
    %v1194 = vpop.f32.mrf.mxu0
    %v1195 = vadd.f32 %v1124, %v1194
    %1196 = vdwg.mxu0
    %1197 = vmatpush.msra.mxu0 0.0
    %1198 = vmatpush.msra.mxu0 0.0
    %1199 = vmatpush.msra.mxu0 0.0
    %1200 = vmatpush.msra.mxu0 0.0
    %1201 = vmatpush.msra.mxu0 0.0
    %1202 = vmatpush.msra.mxu0 0.0
    %1203 = vmatpush.msra.mxu0 0.0
    %1204 = vmatpush.msra.mxu0 0.0
    %1205 = vmatpush.msra.mxu0 0.0
    %1206 = vmatpush.msra.mxu0 0.0
    %1207 = vmatpush.msra.mxu0 0.0
    %1208 = vmatpush.msra.mxu0 0.0
    %1209 = vmatpush.msra.mxu0 0.0
    %1210 = vmatpush.msra.mxu0 0.0
    %1211 = vmatpush.msra.mxu0 0.0
    %1212 = vmatpush.msra.mxu0 %v906
    %1213 = vmatmul.f32.gmra.mxu0 %v1155
    %v1214 = vpop.f32.mrf.mxu0
    %v1215 = vadd.f32 %v1137, %v1214
    %1216 = vdwg.mxu0
    %1217 = vmatpush.msra.mxu0 0.0
    %1218 = vmatpush.msra.mxu0 0.0
    %1219 = vmatpush.msra.mxu0 0.0
    %1220 = vmatpush.msra.mxu0 0.0
    %1221 = vmatpush.msra.mxu0 0.0
    %1222 = vmatpush.msra.mxu0 0.0
    %1223 = vmatpush.msra.mxu0 0.0
    %1224 = vmatpush.msra.mxu0 0.0
    %1225 = vmatpush.msra.mxu0 0.0
    %1226 = vmatpush.msra.mxu0 0.0
    %1227 = vmatpush.msra.mxu0 0.0
    %1228 = vmatpush.msra.mxu0 0.0
    %1229 = vmatpush.msra.mxu0 0.0
    %1230 = vmatpush.msra.mxu0 0.0
    %1231 = vmatpush.msra.mxu0 0.0
    %1232 = vmatpush.msra.mxu0 %v907
    %1233 = vmatmul.f32.gmra.mxu0 %v1155
    %v1234 = vpop.f32.mrf.mxu0
    %v1235 = vadd.f32 %v1150, %v1234
    %1236 = vdwg.mxu0
    %v1237 = vpack.c.bf16 %v887, %v887
    %v1238 = vld [vmem:[%s19] sm:$0xff]
    %v1239 = vld [vmem:[%s19 + $0x8] sm:$0xff]
    %v1240 = vld [vmem:[%s19 + $0x10] sm:$0xff]
    %v1241 = vld [vmem:[%s19 + $0x18] sm:$0xff]
    %v1242 = vld [vmem:[%s19 + $0x20] sm:$0xff]
    %v1243 = vld [vmem:[%s19 + $0x28] sm:$0xff]
    %v1244 = vld [vmem:[%s19 + $0x30] sm:$0xff]
    %v1245 = vld [vmem:[%s19 + $0x38] sm:$0xff]
    %v1246 = vld [vmem:[%s19 + $0x40] sm:$0xff]
    %v1247 = vld [vmem:[%s19 + $0x48] sm:$0xff]
    %v1248 = vld [vmem:[%s19 + $0x50] sm:$0xff]
    %v1249 = vld [vmem:[%s19 + $0x58] sm:$0xff]
    %v1250 = vld [vmem:[%s19 + $0x60] sm:$0xff]
    %v1251 = vld [vmem:[%s19 + $0x68] sm:$0xff]
    %v1252 = vld [vmem:[%s19 + $0x70] sm:$0xff]
    %v1253 = vld [vmem:[%s19 + $0x78] sm:$0xff]
    %v1254 = vld [vmem:[%s19 + $0x80] sm:$0xff]
    %v1255 = vld [vmem:[%s19 + $0x88] sm:$0xff]
    %v1256 = vld [vmem:[%s19 + $0x90] sm:$0xff]
    %v1257 = vld [vmem:[%s19 + $0x98] sm:$0xff]
    %v1258 = vld [vmem:[%s19 + $0xa0] sm:$0xff]
    %v1259 = vld [vmem:[%s19 + $0xa8] sm:$0xff]
    %v1260 = vld [vmem:[%s19 + $0xb0] sm:$0xff]
    %v1261 = vld [vmem:[%s19 + $0xb8] sm:$0xff]
    %v1262 = vld [vmem:[%s19 + $0xc0] sm:$0xff]
    %v1263 = vld [vmem:[%s19 + $0xc8] sm:$0xff]
    %v1264 = vld [vmem:[%s19 + $0xd0] sm:$0xff]
    %v1265 = vld [vmem:[%s19 + $0xd8] sm:$0xff]
    %v1266 = vld [vmem:[%s19 + $0xe0] sm:$0xff]
    %v1267 = vld [vmem:[%s19 + $0xe8] sm:$0xff]
    %v1268 = vld [vmem:[%s19 + $0xf0] sm:$0xff]
    %v1269 = vld [vmem:[%s19 + $0xf8] sm:$0xff]
    %v1302 = vunpack.c.l.b16 %v1238
    %v1303 = vunpack.c.h.b16 %v1238
    %v1304 = vunpack.c.l.b16 %v1239
    %v1305 = vunpack.c.h.b16 %v1239
    %v1306 = vunpack.c.l.b16 %v1240
    %v1307 = vunpack.c.h.b16 %v1240
    %v1308 = vunpack.c.l.b16 %v1241
    %v1309 = vunpack.c.h.b16 %v1241
    %v1310 = vunpack.c.l.b16 %v1242
    %v1311 = vunpack.c.h.b16 %v1242
    %v1312 = vunpack.c.l.b16 %v1243
    %v1313 = vunpack.c.h.b16 %v1243
    %v1314 = vunpack.c.l.b16 %v1244
    %v1315 = vunpack.c.h.b16 %v1244
    %v1316 = vunpack.c.l.b16 %v1245
    %v1317 = vunpack.c.h.b16 %v1245
    %v1318 = vunpack.c.l.b16 %v1246
    %v1319 = vunpack.c.h.b16 %v1246
    %v1320 = vunpack.c.l.b16 %v1247
    %v1321 = vunpack.c.h.b16 %v1247
    %v1322 = vunpack.c.l.b16 %v1248
    %v1323 = vunpack.c.h.b16 %v1248
    %v1324 = vunpack.c.l.b16 %v1249
    %v1325 = vunpack.c.h.b16 %v1249
    %v1326 = vunpack.c.l.b16 %v1250
    %v1327 = vunpack.c.h.b16 %v1250
    %v1328 = vunpack.c.l.b16 %v1251
    %v1329 = vunpack.c.h.b16 %v1251
    %v1330 = vunpack.c.l.b16 %v1252
    %v1331 = vunpack.c.h.b16 %v1252
    %v1332 = vunpack.c.l.b16 %v1253
    %v1333 = vunpack.c.h.b16 %v1253
    %v1334 = vunpack.c.l.b16 %v1254
    %v1335 = vunpack.c.h.b16 %v1254
    %v1336 = vunpack.c.l.b16 %v1255
    %v1337 = vunpack.c.h.b16 %v1255
    %v1338 = vunpack.c.l.b16 %v1256
    %v1339 = vunpack.c.h.b16 %v1256
    %v1340 = vunpack.c.l.b16 %v1257
    %v1341 = vunpack.c.h.b16 %v1257
    %v1342 = vunpack.c.l.b16 %v1258
    %v1343 = vunpack.c.h.b16 %v1258
    %v1344 = vunpack.c.l.b16 %v1259
    %v1345 = vunpack.c.h.b16 %v1259
    %v1346 = vunpack.c.l.b16 %v1260
    %v1347 = vunpack.c.h.b16 %v1260
    %v1348 = vunpack.c.l.b16 %v1261
    %v1349 = vunpack.c.h.b16 %v1261
    %v1350 = vunpack.c.l.b16 %v1262
    %v1351 = vunpack.c.h.b16 %v1262
    %v1352 = vunpack.c.l.b16 %v1263
    %v1353 = vunpack.c.h.b16 %v1263
    %v1354 = vunpack.c.l.b16 %v1264
    %v1355 = vunpack.c.h.b16 %v1264
    %v1356 = vunpack.c.l.b16 %v1265
    %v1357 = vunpack.c.h.b16 %v1265
    %v1358 = vunpack.c.l.b16 %v1266
    %v1359 = vunpack.c.h.b16 %v1266
    %v1360 = vunpack.c.l.b16 %v1267
    %v1361 = vunpack.c.h.b16 %v1267
    %v1362 = vunpack.c.l.b16 %v1268
    %v1363 = vunpack.c.h.b16 %v1268
    %v1364 = vunpack.c.l.b16 %v1269
    %v1365 = vunpack.c.h.b16 %v1269
    %v1366 = vpack.c.b16 %v1306, %v1302
    %v1367 = vpack.c.b16 %v1307, %v1303
    %v1368 = vpack.c.b16 %v1308, %v1304
    %v1369 = vpack.c.b16 %v1309, %v1305
    %v1370 = vpack.c.b16 %v1314, %v1310
    %v1371 = vpack.c.b16 %v1315, %v1311
    %v1372 = vpack.c.b16 %v1316, %v1312
    %v1373 = vpack.c.b16 %v1317, %v1313
    %v1374 = vpack.c.b16 %v1322, %v1318
    %v1375 = vpack.c.b16 %v1323, %v1319
    %v1376 = vpack.c.b16 %v1324, %v1320
    %v1377 = vpack.c.b16 %v1325, %v1321
    %v1378 = vpack.c.b16 %v1330, %v1326
    %v1379 = vpack.c.b16 %v1331, %v1327
    %v1380 = vpack.c.b16 %v1332, %v1328
    %v1381 = vpack.c.b16 %v1333, %v1329
    %v1382 = vpack.c.b16 %v1338, %v1334
    %v1383 = vpack.c.b16 %v1339, %v1335
    %v1384 = vpack.c.b16 %v1340, %v1336
    %v1385 = vpack.c.b16 %v1341, %v1337
    %v1386 = vpack.c.b16 %v1346, %v1342
    %v1387 = vpack.c.b16 %v1347, %v1343
    %v1388 = vpack.c.b16 %v1348, %v1344
    %v1389 = vpack.c.b16 %v1349, %v1345
    %v1390 = vpack.c.b16 %v1354, %v1350
    %v1391 = vpack.c.b16 %v1355, %v1351
    %v1392 = vpack.c.b16 %v1356, %v1352
    %v1393 = vpack.c.b16 %v1357, %v1353
    %v1394 = vpack.c.b16 %v1362, %v1358
    %v1395 = vpack.c.b16 %v1363, %v1359
    %v1396 = vpack.c.b16 %v1364, %v1360
    %v1397 = vpack.c.b16 %v1365, %v1361
    %1430 = vmatpush.bf16.msra.mxu0 %v1394
    %1431 = vmatpush.bf16.msra.mxu0 %v1390
    %1432 = vmatpush.bf16.msra.mxu0 %v1386
    %1433 = vmatpush.bf16.msra.mxu0 %v1382
    %1434 = vmatpush.bf16.msra.mxu0 %v1378
    %1435 = vmatpush.bf16.msra.mxu0 %v1374
    %1436 = vmatpush.bf16.msra.mxu0 %v1370
    %1437 = vmatpush.bf16.msra.mxu0 %v1366
    %1438 = vmatmul.bf16.gmra.mxu0 %v1237
    %v1439 = vpop.f32.mrf.mxu0
    %v1440 = vadd.f32 0.0, %v1439
    %v1441 = vpop.f32.mrf.mxu0
    %1442 = vdwg.mxu0
    %1443 = vmatpush.bf16.msra.mxu0 %v1395
    %1444 = vmatpush.bf16.msra.mxu0 %v1391
    %1445 = vmatpush.bf16.msra.mxu0 %v1387
    %1446 = vmatpush.bf16.msra.mxu0 %v1383
    %1447 = vmatpush.bf16.msra.mxu0 %v1379
    %1448 = vmatpush.bf16.msra.mxu0 %v1375
    %1449 = vmatpush.bf16.msra.mxu0 %v1371
    %1450 = vmatpush.bf16.msra.mxu0 %v1367
    %1451 = vmatmul.bf16.gmra.mxu0 %v1237
    %v1452 = vpop.f32.mrf.mxu0
    %v1453 = vadd.f32 0.0, %v1452
    %v1454 = vpop.f32.mrf.mxu0
    %1455 = vdwg.mxu0
    %1456 = vmatpush.bf16.msra.mxu0 %v1396
    %1457 = vmatpush.bf16.msra.mxu0 %v1392
    %1458 = vmatpush.bf16.msra.mxu0 %v1388
    %1459 = vmatpush.bf16.msra.mxu0 %v1384
    %1460 = vmatpush.bf16.msra.mxu0 %v1380
    %1461 = vmatpush.bf16.msra.mxu0 %v1376
    %1462 = vmatpush.bf16.msra.mxu0 %v1372
    %1463 = vmatpush.bf16.msra.mxu0 %v1368
    %1464 = vmatmul.bf16.gmra.mxu0 %v1237
    %v1465 = vpop.f32.mrf.mxu0
    %v1466 = vadd.f32 0.0, %v1465
    %v1467 = vpop.f32.mrf.mxu0
    %1468 = vdwg.mxu0
    %1469 = vmatpush.bf16.msra.mxu0 %v1397
    %1470 = vmatpush.bf16.msra.mxu0 %v1393
    %1471 = vmatpush.bf16.msra.mxu0 %v1389
    %1472 = vmatpush.bf16.msra.mxu0 %v1385
    %1473 = vmatpush.bf16.msra.mxu0 %v1381
    %1474 = vmatpush.bf16.msra.mxu0 %v1377
    %1475 = vmatpush.bf16.msra.mxu0 %v1373
    %1476 = vmatpush.bf16.msra.mxu0 %v1369
    %1477 = vmatmul.bf16.gmra.mxu0 %v1237
    %v1478 = vpop.f32.mrf.mxu0
    %v1479 = vadd.f32 0.0, %v1478
    %v1480 = vpop.f32.mrf.mxu0
    %1481 = vdwg.mxu0
    %v1482 = vadd.f32 %v1175, %v1440
    %v1483 = vadd.f32 %v1195, %v1453
    %v1484 = vadd.f32 %v1215, %v1466
    %v1485 = vadd.f32 %v1235, %v1479
    %v1486 = vld [vmem:[%s20] sm:$0xf]
    %v1488 = vperm.slane %v1486, 0
    %v1489 = vperm.slane %v1486, 1
    %v1490 = vperm.slane %v1486, 2
    %v1491 = vperm.slane %v1486, 3
    %v1496 = vadd.f32 %v1482, %v1488
    %v1497 = vadd.f32 %v1483, %v1489
    %v1498 = vadd.f32 %v1484, %v1490
    %v1499 = vadd.f32 %v1485, %v1491
    %v1500 = vxor.u32 %v1496, 2147483648
    %v1501 = vxor.u32 %v1497, 2147483648
    %v1502 = vxor.u32 %v1498, 2147483648
    %v1503 = vmul.f32 %v1500, 1.442695
    %v1504 = vpow.pop %v1503
    %v1505 = vmul.f32 %v1501, 1.442695
    %v1506 = vpow.pop %v1505
    %v1507 = vmul.f32 %v1502, 1.442695
    %v1508 = vpow.pop %v1507
    %v1509 = vadd.f32 %v1504, 1.0
    %v1510 = vadd.f32 %v1506, 1.0
    %v1511 = vadd.f32 %v1508, 1.0
    %v1512 = vrcp.pop %v1509
    %v1513 = vmul.f32 %v1509, %v1512
    %v1514 = vsub.f32 1.0, %v1513
    %v1515 = vmul.f32 %v1512, %v1514
    %v1516 = vadd.f32 %v1512, %v1515
    %vm1517 = vweird.f32 %v1509
    %vm1518 = vweird.f32 %v1512
    %vm1519 = vmor %vm1517, %vm1518
    %v1520 = vsel %vm1519, %v1512, %v1516
    %v1521 = vand.u32 2147483647, %v1509
    %vm1522 = vcmp.eq.f32.partialorder %v1521, 8.507059e+37
    %v1523 = vand.u32 %v1509, 2147483648
    %v1524 = vor.u32 1.1754944e-38, %v1523
    %v1525 = vsel %vm1522, %v1524, %v1520
    %v1526 = vmul.f32 1.0, %v1525
    %v1527 = vrcp.pop %v1510
    %v1528 = vmul.f32 %v1510, %v1527
    %v1529 = vsub.f32 1.0, %v1528
    %v1530 = vmul.f32 %v1527, %v1529
    %v1531 = vadd.f32 %v1527, %v1530
    %vm1532 = vweird.f32 %v1510
    %vm1533 = vweird.f32 %v1527
    %vm1534 = vmor %vm1532, %vm1533
    %v1535 = vsel %vm1534, %v1527, %v1531
    %v1536 = vand.u32 2147483647, %v1510
    %vm1537 = vcmp.eq.f32.partialorder %v1536, 8.507059e+37
    %v1538 = vand.u32 %v1510, 2147483648
    %v1539 = vor.u32 1.1754944e-38, %v1538
    %v1540 = vsel %vm1537, %v1539, %v1535
    %v1541 = vmul.f32 1.0, %v1540
    %v1542 = vrcp.pop %v1511
    %v1543 = vmul.f32 %v1511, %v1542
    %v1544 = vsub.f32 1.0, %v1543
    %v1545 = vmul.f32 %v1542, %v1544
    %v1546 = vadd.f32 %v1542, %v1545
    %vm1547 = vweird.f32 %v1511
    %vm1548 = vweird.f32 %v1542
    %vm1549 = vmor %vm1547, %vm1548
    %v1550 = vsel %vm1549, %v1542, %v1546
    %v1551 = vand.u32 2147483647, %v1511
    %vm1552 = vcmp.eq.f32.partialorder %v1551, 8.507059e+37
    %v1553 = vand.u32 %v1511, 2147483648
    %v1554 = vor.u32 1.1754944e-38, %v1553
    %v1555 = vsel %vm1552, %v1554, %v1550
    %v1556 = vmul.f32 1.0, %v1555
    %v1557 = vtanh.pop %v1499
    %v1558 = vmul.f32 %v1541, %v890
    %v1559 = vmul.f32 %v1526, %v1557
    %v1560 = vadd.f32 %v1558, %v1559
    %v1561 = vtanh.pop %v1560
    %v1562 = vmul.f32 %v1556, %v1561
    %1563 = vst [vmem:[%s22] sm:$0xff] %v1562
    %s1564 = scalar_lea.vmem %s22, 8
    %1565 = vst [vmem:[%s1564] sm:$0xff] %v1560
    // Predicated region
    $region90: #{cnn_lstm_net_forward.1} parent=1 // pred_check
      _
    $region91: #{cnn_lstm_net_forward.1} parent=1 // pred_check_branch
      %1567 = sbr.rel (0) target = $region93
    $region92: #{cnn_lstm_net_forward.1} parent=1 // pred_region
      _
    $region93: #{cnn_lstm_net_forward.1} parent=1 // pred_fallthru
      _
    // Predicated region
    $region94: #{cnn_lstm_net_forward.1} parent=1 // pred_check
      _
    $region95: #{cnn_lstm_net_forward.1} parent=1 // pred_check_branch
      %1569 = sbr.rel (0) target = $region97
    $region96: #{cnn_lstm_net_forward.1} parent=1 // pred_region
      _
    $region97: #{cnn_lstm_net_forward.1} parent=1 // pred_fallthru
      _
    // Predicated region
    $region98: #{cnn_lstm_net_forward.1} parent=1 // pred_check
      _
    $region99: #{cnn_lstm_net_forward.1} parent=1 // pred_check_branch
      %1571 = sbr.rel (0) target = $region101
    $region100: #{cnn_lstm_net_forward.1} parent=1 // pred_region
      _
    $region101: #{cnn_lstm_net_forward.1} parent=1 // pred_fallthru
      _
    // Predicated region
    $region102: #{cnn_lstm_net_forward.1} parent=1 // pred_check
      _
    $region103: #{cnn_lstm_net_forward.1} parent=1 // pred_check_branch
      %1573 = sbr.rel (0) target = $region105
    $region104: #{cnn_lstm_net_forward.1} parent=1 // pred_region
      _
    $region105: #{cnn_lstm_net_forward.1} parent=1 // pred_fallthru
      _
    %1574 = vsyncpa [#allocation3], 1

</llo_original>
